<compile_context>
chip_gen: v7x
topology: tpu7x:2x2x1
jax: 0.10.0
libtpu: 0.0.40
codegen_flags: <defaults>
</compile_context>

<pallas_src>
import jax
import jax.numpy as jnp
from jax.experimental import pallas as pl
from jax.experimental.pallas import tpu as pltpu

EPS = 1e-5


# ----------------------------- in-kernel helpers -----------------------------
def _fill_padded_rows(pad_scr, rows):
    """Write the (H, W*C) sample into rows 1..H of the (H+2, W*C) f32 scratch
    and zero the two halo rows (re-zeroed every step: see header comment)."""
    Hp, WC = pad_scr.shape
    H = Hp - 2
    zero_row = jnp.zeros((1, WC), pad_scr.dtype)
    pad_scr[0:1, :] = zero_row
    pad_scr[H + 1:H + 2, :] = zero_row
    pad_scr[1:H + 1, :] = rows


def _conv3x3_rows(pad_scr, t):
    """3x3 'same' conv on width-flattened rows: three bf16 MXU matmuls
    (H, W*Cin) @ (W*Cin, W*Cout), one per kh, accumulated in f32.
    `t` is the (3, W*Cin, W*Cout) block-Toeplitz weight (bf16)."""
    Hp, _ = pad_scr.shape
    H = Hp - 2
    acc = None
    for kh in range(3):
        p = jnp.dot(pad_scr[kh:kh + H, :].astype(jnp.bfloat16), t[kh],
                    preferred_element_type=jnp.float32)
        acc = p if acc is None else acc + p
    return acc                                               # (H, W*Cout) f32


# --------------------------------- kernels -----------------------------------
def _conv1_kernel(x_ref, t_ref, y_ref, ssum_ref, ssq_ref, pad_scr):
    """conv1 on one sample + per-sample partial BN1 statistics (from the f32
    accumulator, before the bf16 store)."""
    _, H, WC = x_ref.shape
    _fill_padded_rows(pad_scr, x_ref[...].reshape(H, WC))
    y = _conv3x3_rows(pad_scr, t_ref[...])
    y_ref[...] = y.astype(y_ref.dtype).reshape(1, H, WC)
    ssum_ref[...] = jnp.sum(y, axis=0, keepdims=True).reshape(1, 1, WC)
    ssq_ref[...] = jnp.sum(y * y, axis=0, keepdims=True).reshape(1, 1, WC)


def _conv2_kernel(y_ref, scale_ref, shift_ref, t_ref,
                  z_ref, ssum_ref, ssq_ref, pad_scr):
    """bn1 (folded per-channel affine, tiled over W) + relu + conv2 on one
    sample + per-sample partial BN2 statistics."""
    _, H, WC = y_ref.shape
    a = jnp.maximum(y_ref[...].astype(jnp.float32) * scale_ref[...]
                    + shift_ref[...], 0.0)                   # (1, H, WC) f32
    _fill_padded_rows(pad_scr, a.reshape(H, WC))
    z = _conv3x3_rows(pad_scr, t_ref[...])
    z_ref[...] = z.astype(z_ref.dtype).reshape(1, H, WC)
    ssum_ref[...] = jnp.sum(z, axis=0, keepdims=True).reshape(1, 1, WC)
    ssq_ref[...] = jnp.sum(z * z, axis=0, keepdims=True).reshape(1, 1, WC)


def _bn2_res_relu_kernel(z_ref, x_ref, scale_ref, shift_ref, out_ref):
    """bn2 (folded affine) + residual add (f32) + relu on one sample."""
    out_ref[...] = jnp.maximum(
        z_ref[...].astype(jnp.float32) * scale_ref[...] + shift_ref[...]
        + x_ref[...], 0.0)


# ------------------------------ wrapper helpers -------------------------------
def _toeplitz_weights(w_hwio, W):
    """(3, 3, Cin, Cout) HWIO -> (3, W*Cin, W*Cout) block-Toeplitz over width.
    out_rows[h] = sum_kh pad_rows[h + kh] @ T[kh]; the width-direction 'same'
    padding is folded into the band (out-of-range taps simply absent)."""
    _, _, Ci, Co = w_hwio.shape
    T = jnp.zeros((3, W * Ci, W * Co), w_hwio.dtype)
    for w in range(W):
        for kw in range(3):
            wp = w + kw - 1
            if 0 <= wp < W:
                T = T.at[:, wp * Ci:(wp + 1) * Ci,
                         w * Co:(w + 1) * Co].set(w_hwio[:, kw])
    return T


def _bn_affine_rows(ssum, ssq, gamma, beta, count, W):
    """Fold training-mode BatchNorm into per-channel (scale, shift), then tile
    over the W positions of the flattened (W*C) lane layout.
    NOTE: single-pass var = E[x^2] - E[x]^2 in f32; fine at these scales, use a
    shifted / two-pass form if |mean| >> std and tolerances tighten."""
    C = gamma.shape[0]
    s = jnp.sum(ssum.reshape(-1, W, C), axis=(0, 1))          # (C,)
    q = jnp.sum(ssq.reshape(-1, W, C), axis=(0, 1))           # (C,)
    mean = s / count
    var = q / count - mean * mean                             # biased variance
    scale = gamma.astype(jnp.float32) * jax.lax.rsqrt(var + EPS)
    shift = beta.astype(jnp.float32) - mean * scale
    return (jnp.tile(scale, W).reshape(1, W * C),
            jnp.tile(shift, W).reshape(1, W * C))


# --------------------------------- wrappers ------------------------------------
def _block_nhwc(x, params):
    """x: (N, H, W, C) float32 NHWC.  Returns (N, H, W, C) float32."""
    w1, b1, g1, be1, w2, b2, g2, be2 = params
    del b1, b2          # exactly cancelled by the training-mode BN after each conv

    N, H, W, C = x.shape
    assert w1.shape == (3, 3, C, C) and w2.shape == (3, 3, C, C), \
        "only stride=1, in_channels == out_channels is supported (residual add)"
    WC = W * C
    cnt = float(N * H * W)

    # Lane-dense presentation: collapse (W, C) -> W*C for everything HBM-facing.
    x_rows = x.astype(jnp.float32).reshape(N, H, WC)
    t1 = _toeplitz_weights(w1.astype(jnp.float32), W).astype(jnp.bfloat16)
    t2 = _toeplitz_weights(w2.astype(jnp.float32), W).astype(jnp.bfloat16)

    cparams = pltpu.CompilerParams(dimension_semantics=("parallel",))

    act_spec = pl.BlockSpec((1, H, WC), lambda n: (n, 0, 0))
    wgt_spec = pl.BlockSpec((3, WC, WC), lambda n: (0, 0, 0))   # same block every step
    vec_spec = pl.BlockSpec((1, WC), lambda n: (0, 0))
    stat_spec = pl.BlockSpec((1, 1, WC), lambda n: (n, 0, 0))

    act_f32 = jax.ShapeDtypeStruct((N, H, WC), jnp.float32)
    act_bf16 = jax.ShapeDtypeStruct((N, H, WC), jnp.bfloat16)
    stat_out = jax.ShapeDtypeStruct((N, 1, WC), jnp.float32)
    scratch = [pltpu.VMEM((H + 2, WC), jnp.float32)]

    # ---- phase 1: conv1 (+ per-sample partial BN1 stats) ----
    y1, s1, q1 = pl.pallas_call(
        _conv1_kernel, grid=(N,),
        in_specs=[act_spec, wgt_spec],
        out_specs=(act_spec, stat_spec, stat_spec),
        out_shape=(act_bf16, stat_out, stat_out),
        scratch_shapes=scratch, compiler_params=cparams,
    )(x_rows, t1)
    scale1, shift1 = _bn_affine_rows(s1, q1, g1, be1, cnt, W)

    # ---- phase 2: bn1 + relu -> conv2 (+ per-sample partial BN2 stats) ----
    z, s2, q2 = pl.pallas_call(
        _conv2_kernel, grid=(N,),
        in_specs=[act_spec, vec_spec, vec_spec, wgt_spec],
        out_specs=(act_spec, stat_spec, stat_spec),
        out_shape=(act_bf16, stat_out, stat_out),
        scratch_shapes=scratch, compiler_params=cparams,
    )(y1, scale1, shift1, t2)
    scale2, shift2 = _bn_affine_rows(s2, q2, g2, be2, cnt, W)

    # ---- phase 3: bn2 + residual + relu ----
    out = pl.pallas_call(
        _bn2_res_relu_kernel, grid=(N,),
        in_specs=[act_spec, act_spec, vec_spec, vec_spec],
        out_specs=act_spec,
        out_shape=act_f32,
        compiler_params=cparams,
    )(z, x_rows, scale2, shift2)

    return out.reshape(N, H, W, C)


resnet_basic_block_nhwc = jax.jit(_block_nhwc)   # transpose-free entry for NHWC nets


@jax.jit
def resnet_basic_block(x_nchw, params):
    """PyTorch-interface drop-in: (N, C, H, W) in / out.  The two transposes
    are extra HBM passes; prefer resnet_basic_block_nhwc inside an NHWC net."""
    x = jnp.transpose(x_nchw, (0, 2, 3, 1))
    y = _block_nhwc(x, params)
    return jnp.transpose(y, (0, 3, 1, 2))


# ---------------- pure-JAX f32 reference (for correctness check) ----------------
def _ref_block(x_nchw, params):
    w1, b1, g1, be1, w2, b2, g2, be2 = params
    x = jnp.transpose(x_nchw, (0, 2, 3, 1)).astype(jnp.float32)

    def conv(a, w, b):
        y = jax.lax.conv_general_dilated(
            a, w, window_strides=(1, 1), padding=((1, 1), (1, 1)),
            dimension_numbers=('NHWC', 'HWIO', 'NHWC'))
        return y + b.reshape(1, 1, 1, -1)

    def bn(y, g, be):
        m = y.mean(axis=(0, 1, 2), keepdims=True)
        v = ((y - m) ** 2).mean(axis=(0, 1, 2), keepdims=True)
        return (y - m) * jax.lax.rsqrt(v + EPS) * g.reshape(1, 1, 1, -1) \
               + be.reshape(1, 1, 1, -1)

    y = jax.nn.relu(bn(conv(x, w1, b1), g1, be1))
    z = bn(conv(y, w2, b2), g2, be2)
    return jnp.transpose(jax.nn.relu(x + z), (0, 3, 1, 2))


if __name__ == "__main__":
    N, C, H, W = 2, 4, 16, 16        # in_channels == out_channels, stride == 1
    key = jax.random.PRNGKey(0)
    kx, k1, kb1, k2, kb2 = jax.random.split(key, 5)

    x = jax.random.normal(kx, (N, C, H, W), dtype=jnp.float32)

    fan_in = C * 3 * 3
    bound = 1.0 / (fan_in ** 0.5)
    w1 = jax.random.uniform(k1, (3, 3, C, C), jnp.float32, -bound, bound)
    b1 = jax.random.uniform(kb1, (C,), jnp.float32, -bound, bound)
    w2 = jax.random.uniform(k2, (3, 3, C, C), jnp.float32, -bound, bound)
    b2 = jax.random.uniform(kb2, (C,), jnp.float32, -bound, bound)
    g1 = jnp.ones((C,), jnp.float32)
    be1 = jnp.zeros((C,), jnp.float32)
    g2 = jnp.ones((C,), jnp.float32)
    be2 = jnp.zeros((C,), jnp.float32)

    params = (w1, b1, g1, be1, w2, b2, g2, be2)

    out = jax.block_until_ready(resnet_basic_block(x, params))
    ref = jax.block_until_ready(_ref_block(x, params))

    assert out.shape == (N, C, H, W) and out.dtype == jnp.float32
    err = float(jnp.max(jnp.abs(out - ref)))
    # bf16 MXU operands + bf16 inter-phase activations vs. an all-f32 reference
    # -> bf16-level tolerance.
    assert jnp.allclose(out, ref, atol=5e-2, rtol=5e-2), f"max abs err {err}"

    print("KERNEL_OK")
</pallas_src>

<mosaic_0001>
module attributes {stable_mosaic.version = 11 : i64} {
  func.func @_conv1_kernel(%arg0: i32, %arg1: memref<1x16x64xf32, #tpu.memory_space<vmem>>, %arg2: memref<3x64x64xbf16, #tpu.memory_space<vmem>>, %arg3: memref<1x16x64xbf16, #tpu.memory_space<vmem>>, %arg4: memref<1x1x64xf32, #tpu.memory_space<vmem>>, %arg5: memref<1x1x64xf32, #tpu.memory_space<vmem>>, %arg6: memref<18x64xf32, #tpu.memory_space<vmem>>) attributes {dimension_semantics = [#tpu.dimension_semantics<parallel>], iteration_bounds = array<i64: 2>, scalar_prefetch = 0 : i64, scratch_operands = 1 : i64, tpu.core_type = #tpu.core_type<tc>, window_params = [{transform_indices = @transform_0, window_bounds = array<i64: 1, 16, 64>}, {pipeline_mode = #tpu.pipeline_mode<synchronous>, transform_indices = @transform_1, window_bounds = array<i64: 3, 64, 64>}, {transform_indices = @transform_2, window_bounds = array<i64: 1, 16, 64>}, {transform_indices = @transform_3, window_bounds = array<i64: 1, 1, 64>}, {transform_indices = @transform_4, window_bounds = array<i64: 1, 1, 64>}]} {
    %c0 = arith.constant 0 : index
    %c0_0 = arith.constant 0 : index
    %c0_1 = arith.constant 0 : index
    %0 = vector.load %arg1[%c0, %c0_0, %c0_1] : memref<1x16x64xf32, #tpu.memory_space<vmem>>, vector<1x16x64xf32>
    %1 = vector.shape_cast %0 : vector<1x16x64xf32> to vector<16x64xf32>
    %cst = arith.constant 0.000000e+00 : f32
    %2 = vector.broadcast %cst : f32 to vector<1x64xf32>
    %c0_2 = arith.constant 0 : index
    %c0_3 = arith.constant 0 : index
    %3 = vector.load %arg6[%c0_2, %c0_3] : memref<18x64xf32, #tpu.memory_space<vmem>>, vector<1x64xf32>
    tpu.vector_store %arg6[%c0_2, %c0_3], %2 {strides = array<i32>} : memref<18x64xf32, #tpu.memory_space<vmem>>, vector<1x64xf32>,
    %c17 = arith.constant 17 : index
    %c0_4 = arith.constant 0 : index
    %4 = vector.load %arg6[%c17, %c0_4] : memref<18x64xf32, #tpu.memory_space<vmem>>, vector<1x64xf32>
    tpu.vector_store %arg6[%c17, %c0_4], %2 {strides = array<i32>} : memref<18x64xf32, #tpu.memory_space<vmem>>, vector<1x64xf32>,
    %c1 = arith.constant 1 : index
    %c0_5 = arith.constant 0 : index
    %5 = vector.load %arg6[%c1, %c0_5] : memref<18x64xf32, #tpu.memory_space<vmem>>, vector<16x64xf32>
    tpu.vector_store %arg6[%c1, %c0_5], %1 {strides = array<i32>} : memref<18x64xf32, #tpu.memory_space<vmem>>, vector<16x64xf32>,
    %c0_6 = arith.constant 0 : index
    %c0_7 = arith.constant 0 : index
    %c0_8 = arith.constant 0 : index
    %6 = vector.load %arg2[%c0_6, %c0_7, %c0_8] : memref<3x64x64xbf16, #tpu.memory_space<vmem>>, vector<3x64x64xbf16>
    %c0_9 = arith.constant 0 : index
    %c0_10 = arith.constant 0 : index
    %7 = vector.load %arg6[%c0_9, %c0_10] : memref<18x64xf32, #tpu.memory_space<vmem>>, vector<16x64xf32>
    %8 = arith.truncf %7 : vector<16x64xf32> to vector<16x64xbf16>
    %9 = vector.extract_strided_slice %6 {offsets = [0, 0, 0], sizes = [1, 64, 64], strides = [1, 1, 1]} : vector<3x64x64xbf16> to vector<1x64x64xbf16>
    %10 = vector.shape_cast %9 : vector<1x64x64xbf16> to vector<64x64xbf16>
    %cst_11 = arith.constant dense<0.000000e+00> : vector<16x64xf32>
    %11 = tpu.matmul %8, %10, %cst_11 {dimension_numbers = #tpu.dot_dimension_numbers<[1], [0], [0], [1], [0, 0, 1, 1], [], []>} : vector<16x64xbf16>, vector<64x64xbf16>, vector<16x64xf32> -> vector<16x64xf32>
    %c1_12 = arith.constant 1 : index
    %c0_13 = arith.constant 0 : index
    %12 = vector.load %arg6[%c1_12, %c0_13] : memref<18x64xf32, #tpu.memory_space<vmem>>, vector<16x64xf32>
    %13 = arith.truncf %12 : vector<16x64xf32> to vector<16x64xbf16>
    %14 = vector.extract_strided_slice %6 {offsets = [1, 0, 0], sizes = [1, 64, 64], strides = [1, 1, 1]} : vector<3x64x64xbf16> to vector<1x64x64xbf16>
    %15 = vector.shape_cast %14 : vector<1x64x64xbf16> to vector<64x64xbf16>
    %cst_14 = arith.constant dense<0.000000e+00> : vector<16x64xf32>
    %16 = tpu.matmul %13, %15, %cst_14 {dimension_numbers = #tpu.dot_dimension_numbers<[1], [0], [0], [1], [0, 0, 1, 1], [], []>} : vector<16x64xbf16>, vector<64x64xbf16>, vector<16x64xf32> -> vector<16x64xf32>
    %17 = arith.addf %11, %16 : vector<16x64xf32>
    %c2 = arith.constant 2 : index
    %c0_15 = arith.constant 0 : index
    %18 = vector.load %arg6[%c2, %c0_15] : memref<18x64xf32, #tpu.memory_space<vmem>>, vector<16x64xf32>
    %19 = arith.truncf %18 : vector<16x64xf32> to vector<16x64xbf16>
    %20 = vector.extract_strided_slice %6 {offsets = [2, 0, 0], sizes = [1, 64, 64], strides = [1, 1, 1]} : vector<3x64x64xbf16> to vector<1x64x64xbf16>
    %21 = vector.shape_cast %20 : vector<1x64x64xbf16> to vector<64x64xbf16>
    %cst_16 = arith.constant dense<0.000000e+00> : vector<16x64xf32>
    %22 = tpu.matmul %19, %21, %cst_16 {dimension_numbers = #tpu.dot_dimension_numbers<[1], [0], [0], [1], [0, 0, 1, 1], [], []>} : vector<16x64xbf16>, vector<64x64xbf16>, vector<16x64xf32> -> vector<16x64xf32>
    %23 = arith.addf %17, %22 : vector<16x64xf32>
    %24 = arith.truncf %23 : vector<16x64xf32> to vector<16x64xbf16>
    %25 = vector.shape_cast %24 : vector<16x64xbf16> to vector<1x16x64xbf16>
    %c0_17 = arith.constant 0 : index
    %c0_18 = arith.constant 0 : index
    %c0_19 = arith.constant 0 : index
    %26 = vector.load %arg3[%c0_17, %c0_18, %c0_19] : memref<1x16x64xbf16, #tpu.memory_space<vmem>>, vector<1x16x64xbf16>
    tpu.vector_store %arg3[%c0_17, %c0_18, %c0_19], %25 {strides = array<i32>} : memref<1x16x64xbf16, #tpu.memory_space<vmem>>, vector<1x16x64xbf16>,
    %cst_20 = arith.constant dense<0.000000e+00> : vector<64xf32>
    %27 = vector.multi_reduction <add>, %23, %cst_20 [0] : vector<16x64xf32> to vector<64xf32>
    %28 = vector.shape_cast %27 : vector<64xf32> to vector<1x64xf32>
    %29 = vector.shape_cast %28 : vector<1x64xf32> to vector<1x1x64xf32>
    %c0_21 = arith.constant 0 : index
    %c0_22 = arith.constant 0 : index
    %c0_23 = arith.constant 0 : index
    %30 = vector.load %arg4[%c0_21, %c0_22, %c0_23] : memref<1x1x64xf32, #tpu.memory_space<vmem>>, vector<1x1x64xf32>
    tpu.vector_store %arg4[%c0_21, %c0_22, %c0_23], %29 {strides = array<i32>} : memref<1x1x64xf32, #tpu.memory_space<vmem>>, vector<1x1x64xf32>,
    %31 = arith.mulf %23, %23 : vector<16x64xf32>
    %cst_24 = arith.constant dense<0.000000e+00> : vector<64xf32>
    %32 = vector.multi_reduction <add>, %31, %cst_24 [0] : vector<16x64xf32> to vector<64xf32>
    %33 = vector.shape_cast %32 : vector<64xf32> to vector<1x64xf32>
    %34 = vector.shape_cast %33 : vector<1x64xf32> to vector<1x1x64xf32>
    %c0_25 = arith.constant 0 : index
    %c0_26 = arith.constant 0 : index
    %c0_27 = arith.constant 0 : index
    %35 = vector.load %arg5[%c0_25, %c0_26, %c0_27] : memref<1x1x64xf32, #tpu.memory_space<vmem>>, vector<1x1x64xf32>
    tpu.vector_store %arg5[%c0_25, %c0_26, %c0_27], %34 {strides = array<i32>} : memref<1x1x64xf32, #tpu.memory_space<vmem>>, vector<1x1x64xf32>,
    return
  }
  func.func @transform_0(%arg0: i32) -> (i32, i32, i32) {
    %c0_i32 = arith.constant 0 : i32
    %c0_i32_0 = arith.constant 0 : i32
    %c0_i32_1 = arith.constant 0 : i32
    return %arg0, %c0_i32, %c0_i32_0 : i32, i32, i32
  }
  func.func @transform_1(%arg0: i32) -> (i32, i32, i32) {
    %c0_i32 = arith.constant 0 : i32
    %c0_i32_0 = arith.constant 0 : i32
    %c0_i32_1 = arith.constant 0 : i32
    %c0_i32_2 = arith.constant 0 : i32
    return %c0_i32, %c0_i32_0, %c0_i32_1 : i32, i32, i32
  }
  func.func @transform_2(%arg0: i32) -> (i32, i32, i32) {
    %c0_i32 = arith.constant 0 : i32
    %c0_i32_0 = arith.constant 0 : i32
    %c0_i32_1 = arith.constant 0 : i32
    return %arg0, %c0_i32, %c0_i32_0 : i32, i32, i32
  }
  func.func @transform_3(%arg0: i32) -> (i32, i32, i32) {
    %c0_i32 = arith.constant 0 : i32
    %c0_i32_0 = arith.constant 0 : i32
    %c0_i32_1 = arith.constant 0 : i32
    return %arg0, %c0_i32, %c0_i32_0 : i32, i32, i32
  }
  func.func @transform_4(%arg0: i32) -> (i32, i32, i32) {
    %c0_i32 = arith.constant 0 : i32
    %c0_i32_0 = arith.constant 0 : i32
    %c0_i32_1 = arith.constant 0 : i32
    return %arg0, %c0_i32, %c0_i32_0 : i32, i32, i32
  }
}

module attributes {stable_mosaic.version = 11 : i64} {
  func.func @_conv2_kernel(%arg0: i32, %arg1: memref<1x16x64xbf16, #tpu.memory_space<vmem>>, %arg2: memref<1x64xf32, #tpu.memory_space<vmem>>, %arg3: memref<1x64xf32, #tpu.memory_space<vmem>>, %arg4: memref<3x64x64xbf16, #tpu.memory_space<vmem>>, %arg5: memref<1x16x64xbf16, #tpu.memory_space<vmem>>, %arg6: memref<1x1x64xf32, #tpu.memory_space<vmem>>, %arg7: memref<1x1x64xf32, #tpu.memory_space<vmem>>, %arg8: memref<18x64xf32, #tpu.memory_space<vmem>>) attributes {dimension_semantics = [#tpu.dimension_semantics<parallel>], iteration_bounds = array<i64: 2>, scalar_prefetch = 0 : i64, scratch_operands = 1 : i64, tpu.core_type = #tpu.core_type<tc>, window_params = [{transform_indices = @transform_0, window_bounds = array<i64: 1, 16, 64>}, {pipeline_mode = #tpu.pipeline_mode<synchronous>, transform_indices = @transform_1, window_bounds = array<i64: 1, 64>}, {pipeline_mode = #tpu.pipeline_mode<synchronous>, transform_indices = @transform_2, window_bounds = array<i64: 1, 64>}, {pipeline_mode = #tpu.pipeline_mode<synchronous>, transform_indices = @transform_3, window_bounds = array<i64: 3, 64, 64>}, {transform_indices = @transform_4, window_bounds = array<i64: 1, 16, 64>}, {transform_indices = @transform_5, window_bounds = array<i64: 1, 1, 64>}, {transform_indices = @transform_6, window_bounds = array<i64: 1, 1, 64>}]} {
    %c0 = arith.constant 0 : index
    %c0_0 = arith.constant 0 : index
    %c0_1 = arith.constant 0 : index
    %0 = vector.load %arg1[%c0, %c0_0, %c0_1] : memref<1x16x64xbf16, #tpu.memory_space<vmem>>, vector<1x16x64xbf16>
    %1 = arith.extf %0 : vector<1x16x64xbf16> to vector<1x16x64xf32>
    %c0_2 = arith.constant 0 : index
    %c0_3 = arith.constant 0 : index
    %2 = vector.load %arg2[%c0_2, %c0_3] : memref<1x64xf32, #tpu.memory_space<vmem>>, vector<1x64xf32>
    %3 = vector.shape_cast %2 : vector<1x64xf32> to vector<1x1x64xf32>
    %4 = vector.broadcast %3 : vector<1x1x64xf32> to vector<1x16x64xf32>
    %5 = arith.mulf %1, %4 : vector<1x16x64xf32>
    %c0_4 = arith.constant 0 : index
    %c0_5 = arith.constant 0 : index
    %6 = vector.load %arg3[%c0_4, %c0_5] : memref<1x64xf32, #tpu.memory_space<vmem>>, vector<1x64xf32>
    %7 = vector.shape_cast %6 : vector<1x64xf32> to vector<1x1x64xf32>
    %8 = vector.broadcast %7 : vector<1x1x64xf32> to vector<1x16x64xf32>
    %9 = arith.addf %5, %8 : vector<1x16x64xf32>
    %cst = arith.constant 0.000000e+00 : f32
    %10 = vector.broadcast %cst : f32 to vector<1x16x64xf32>
    %11 = arith.maximumf %9, %10 : vector<1x16x64xf32>
    %12 = vector.shape_cast %11 : vector<1x16x64xf32> to vector<16x64xf32>
    %cst_6 = arith.constant 0.000000e+00 : f32
    %13 = vector.broadcast %cst_6 : f32 to vector<1x64xf32>
    %c0_7 = arith.constant 0 : index
    %c0_8 = arith.constant 0 : index
    %14 = vector.load %arg8[%c0_7, %c0_8] : memref<18x64xf32, #tpu.memory_space<vmem>>, vector<1x64xf32>
    tpu.vector_store %arg8[%c0_7, %c0_8], %13 {strides = array<i32>} : memref<18x64xf32, #tpu.memory_space<vmem>>, vector<1x64xf32>,
    %c17 = arith.constant 17 : index
    %c0_9 = arith.constant 0 : index
    %15 = vector.load %arg8[%c17, %c0_9] : memref<18x64xf32, #tpu.memory_space<vmem>>, vector<1x64xf32>
    tpu.vector_store %arg8[%c17, %c0_9], %13 {strides = array<i32>} : memref<18x64xf32, #tpu.memory_space<vmem>>, vector<1x64xf32>,
    %c1 = arith.constant 1 : index
    %c0_10 = arith.constant 0 : index
    %16 = vector.load %arg8[%c1, %c0_10] : memref<18x64xf32, #tpu.memory_space<vmem>>, vector<16x64xf32>
    tpu.vector_store %arg8[%c1, %c0_10], %12 {strides = array<i32>} : memref<18x64xf32, #tpu.memory_space<vmem>>, vector<16x64xf32>,
    %c0_11 = arith.constant 0 : index
    %c0_12 = arith.constant 0 : index
    %c0_13 = arith.constant 0 : index
    %17 = vector.load %arg4[%c0_11, %c0_12, %c0_13] : memref<3x64x64xbf16, #tpu.memory_space<vmem>>, vector<3x64x64xbf16>
    %c0_14 = arith.constant 0 : index
    %c0_15 = arith.constant 0 : index
    %18 = vector.load %arg8[%c0_14, %c0_15] : memref<18x64xf32, #tpu.memory_space<vmem>>, vector<16x64xf32>
    %19 = arith.truncf %18 : vector<16x64xf32> to vector<16x64xbf16>
    %20 = vector.extract_strided_slice %17 {offsets = [0, 0, 0], sizes = [1, 64, 64], strides = [1, 1, 1]} : vector<3x64x64xbf16> to vector<1x64x64xbf16>
    %21 = vector.shape_cast %20 : vector<1x64x64xbf16> to vector<64x64xbf16>
    %cst_16 = arith.constant dense<0.000000e+00> : vector<16x64xf32>
    %22 = tpu.matmul %19, %21, %cst_16 {dimension_numbers = #tpu.dot_dimension_numbers<[1], [0], [0], [1], [0, 0, 1, 1], [], []>} : vector<16x64xbf16>, vector<64x64xbf16>, vector<16x64xf32> -> vector<16x64xf32>
    %c1_17 = arith.constant 1 : index
    %c0_18 = arith.constant 0 : index
    %23 = vector.load %arg8[%c1_17, %c0_18] : memref<18x64xf32, #tpu.memory_space<vmem>>, vector<16x64xf32>
    %24 = arith.truncf %23 : vector<16x64xf32> to vector<16x64xbf16>
    %25 = vector.extract_strided_slice %17 {offsets = [1, 0, 0], sizes = [1, 64, 64], strides = [1, 1, 1]} : vector<3x64x64xbf16> to vector<1x64x64xbf16>
    %26 = vector.shape_cast %25 : vector<1x64x64xbf16> to vector<64x64xbf16>
    %cst_19 = arith.constant dense<0.000000e+00> : vector<16x64xf32>
    %27 = tpu.matmul %24, %26, %cst_19 {dimension_numbers = #tpu.dot_dimension_numbers<[1], [0], [0], [1], [0, 0, 1, 1], [], []>} : vector<16x64xbf16>, vector<64x64xbf16>, vector<16x64xf32> -> vector<16x64xf32>
    %28 = arith.addf %22, %27 : vector<16x64xf32>
    %c2 = arith.constant 2 : index
    %c0_20 = arith.constant 0 : index
    %29 = vector.load %arg8[%c2, %c0_20] : memref<18x64xf32, #tpu.memory_space<vmem>>, vector<16x64xf32>
    %30 = arith.truncf %29 : vector<16x64xf32> to vector<16x64xbf16>
    %31 = vector.extract_strided_slice %17 {offsets = [2, 0, 0], sizes = [1, 64, 64], strides = [1, 1, 1]} : vector<3x64x64xbf16> to vector<1x64x64xbf16>
    %32 = vector.shape_cast %31 : vector<1x64x64xbf16> to vector<64x64xbf16>
    %cst_21 = arith.constant dense<0.000000e+00> : vector<16x64xf32>
    %33 = tpu.matmul %30, %32, %cst_21 {dimension_numbers = #tpu.dot_dimension_numbers<[1], [0], [0], [1], [0, 0, 1, 1], [], []>} : vector<16x64xbf16>, vector<64x64xbf16>, vector<16x64xf32> -> vector<16x64xf32>
    %34 = arith.addf %28, %33 : vector<16x64xf32>
    %35 = arith.truncf %34 : vector<16x64xf32> to vector<16x64xbf16>
    %36 = vector.shape_cast %35 : vector<16x64xbf16> to vector<1x16x64xbf16>
    %c0_22 = arith.constant 0 : index
    %c0_23 = arith.constant 0 : index
    %c0_24 = arith.constant 0 : index
    %37 = vector.load %arg5[%c0_22, %c0_23, %c0_24] : memref<1x16x64xbf16, #tpu.memory_space<vmem>>, vector<1x16x64xbf16>
    tpu.vector_store %arg5[%c0_22, %c0_23, %c0_24], %36 {strides = array<i32>} : memref<1x16x64xbf16, #tpu.memory_space<vmem>>, vector<1x16x64xbf16>,
    %cst_25 = arith.constant dense<0.000000e+00> : vector<64xf32>
    %38 = vector.multi_reduction <add>, %34, %cst_25 [0] : vector<16x64xf32> to vector<64xf32>
    %39 = vector.shape_cast %38 : vector<64xf32> to vector<1x64xf32>
    %40 = vector.shape_cast %39 : vector<1x64xf32> to vector<1x1x64xf32>
    %c0_26 = arith.constant 0 : index
    %c0_27 = arith.constant 0 : index
    %c0_28 = arith.constant 0 : index
    %41 = vector.load %arg6[%c0_26, %c0_27, %c0_28] : memref<1x1x64xf32, #tpu.memory_space<vmem>>, vector<1x1x64xf32>
    tpu.vector_store %arg6[%c0_26, %c0_27, %c0_28], %40 {strides = array<i32>} : memref<1x1x64xf32, #tpu.memory_space<vmem>>, vector<1x1x64xf32>,
    %42 = arith.mulf %34, %34 : vector<16x64xf32>
    %cst_29 = arith.constant dense<0.000000e+00> : vector<64xf32>
    %43 = vector.multi_reduction <add>, %42, %cst_29 [0] : vector<16x64xf32> to vector<64xf32>
    %44 = vector.shape_cast %43 : vector<64xf32> to vector<1x64xf32>
    %45 = vector.shape_cast %44 : vector<1x64xf32> to vector<1x1x64xf32>
    %c0_30 = arith.constant 0 : index
    %c0_31 = arith.constant 0 : index
    %c0_32 = arith.constant 0 : index
    %46 = vector.load %arg7[%c0_30, %c0_31, %c0_32] : memref<1x1x64xf32, #tpu.memory_space<vmem>>, vector<1x1x64xf32>
    tpu.vector_store %arg7[%c0_30, %c0_31, %c0_32], %45 {strides = array<i32>} : memref<1x1x64xf32, #tpu.memory_space<vmem>>, vector<1x1x64xf32>,
    return
  }
  func.func @transform_0(%arg0: i32) -> (i32, i32, i32) {
    %c0_i32 = arith.constant 0 : i32
    %c0_i32_0 = arith.constant 0 : i32
    %c0_i32_1 = arith.constant 0 : i32
    return %arg0, %c0_i32, %c0_i32_0 : i32, i32, i32
  }
  func.func @transform_1(%arg0: i32) -> (i32, i32) {
    %c0_i32 = arith.constant 0 : i32
    %c0_i32_0 = arith.constant 0 : i32
    %c0_i32_1 = arith.constant 0 : i32
    return %c0_i32, %c0_i32_0 : i32, i32
  }
  func.func @transform_2(%arg0: i32) -> (i32, i32) {
    %c0_i32 = arith.constant 0 : i32
    %c0_i32_0 = arith.constant 0 : i32
    %c0_i32_1 = arith.constant 0 : i32
    return %c0_i32, %c0_i32_0 : i32, i32
  }
  func.func @transform_3(%arg0: i32) -> (i32, i32, i32) {
    %c0_i32 = arith.constant 0 : i32
    %c0_i32_0 = arith.constant 0 : i32
    %c0_i32_1 = arith.constant 0 : i32
    %c0_i32_2 = arith.constant 0 : i32
    return %c0_i32, %c0_i32_0, %c0_i32_1 : i32, i32, i32
  }
  func.func @transform_4(%arg0: i32) -> (i32, i32, i32) {
    %c0_i32 = arith.constant 0 : i32
    %c0_i32_0 = arith.constant 0 : i32
    %c0_i32_1 = arith.constant 0 : i32
    return %arg0, %c0_i32, %c0_i32_0 : i32, i32, i32
  }
  func.func @transform_5(%arg0: i32) -> (i32, i32, i32) {
    %c0_i32 = arith.constant 0 : i32
    %c0_i32_0 = arith.constant 0 : i32
    %c0_i32_1 = arith.constant 0 : i32
    return %arg0, %c0_i32, %c0_i32_0 : i32, i32, i32
  }
  func.func @transform_6(%arg0: i32) -> (i32, i32, i32) {
    %c0_i32 = arith.constant 0 : i32
    %c0_i32_0 = arith.constant 0 : i32
    %c0_i32_1 = arith.constant 0 : i32
    return %arg0, %c0_i32, %c0_i32_0 : i32, i32, i32
  }
}

module attributes {stable_mosaic.version = 11 : i64} {
  func.func @_bn2_res_relu_kernel(%arg0: i32, %arg1: memref<1x16x64xbf16, #tpu.memory_space<vmem>>, %arg2: memref<1x16x64xf32, #tpu.memory_space<vmem>>, %arg3: memref<1x64xf32, #tpu.memory_space<vmem>>, %arg4: memref<1x64xf32, #tpu.memory_space<vmem>>, %arg5: memref<1x16x64xf32, #tpu.memory_space<vmem>>) attributes {dimension_semantics = [#tpu.dimension_semantics<parallel>], iteration_bounds = array<i64: 2>, scalar_prefetch = 0 : i64, scratch_operands = 0 : i64, tpu.core_type = #tpu.core_type<tc>, window_params = [{transform_indices = @transform_0, window_bounds = array<i64: 1, 16, 64>}, {transform_indices = @transform_1, window_bounds = array<i64: 1, 16, 64>}, {pipeline_mode = #tpu.pipeline_mode<synchronous>, transform_indices = @transform_2, window_bounds = array<i64: 1, 64>}, {pipeline_mode = #tpu.pipeline_mode<synchronous>, transform_indices = @transform_3, window_bounds = array<i64: 1, 64>}, {transform_indices = @transform_4, window_bounds = array<i64: 1, 16, 64>}]} {
    %c0 = arith.constant 0 : index
    %c0_0 = arith.constant 0 : index
    %c0_1 = arith.constant 0 : index
    %0 = vector.load %arg1[%c0, %c0_0, %c0_1] : memref<1x16x64xbf16, #tpu.memory_space<vmem>>, vector<1x16x64xbf16>
    %1 = arith.extf %0 : vector<1x16x64xbf16> to vector<1x16x64xf32>
    %c0_2 = arith.constant 0 : index
    %c0_3 = arith.constant 0 : index
    %2 = vector.load %arg3[%c0_2, %c0_3] : memref<1x64xf32, #tpu.memory_space<vmem>>, vector<1x64xf32>
    %3 = vector.shape_cast %2 : vector<1x64xf32> to vector<1x1x64xf32>
    %4 = vector.broadcast %3 : vector<1x1x64xf32> to vector<1x16x64xf32>
    %5 = arith.mulf %1, %4 : vector<1x16x64xf32>
    %c0_4 = arith.constant 0 : index
    %c0_5 = arith.constant 0 : index
    %6 = vector.load %arg4[%c0_4, %c0_5] : memref<1x64xf32, #tpu.memory_space<vmem>>, vector<1x64xf32>
    %7 = vector.shape_cast %6 : vector<1x64xf32> to vector<1x1x64xf32>
    %8 = vector.broadcast %7 : vector<1x1x64xf32> to vector<1x16x64xf32>
    %9 = arith.addf %5, %8 : vector<1x16x64xf32>
    %c0_6 = arith.constant 0 : index
    %c0_7 = arith.constant 0 : index
    %c0_8 = arith.constant 0 : index
    %10 = vector.load %arg2[%c0_6, %c0_7, %c0_8] : memref<1x16x64xf32, #tpu.memory_space<vmem>>, vector<1x16x64xf32>
    %11 = arith.addf %9, %10 : vector<1x16x64xf32>
    %cst = arith.constant 0.000000e+00 : f32
    %12 = vector.broadcast %cst : f32 to vector<1x16x64xf32>
    %13 = arith.maximumf %11, %12 : vector<1x16x64xf32>
    %c0_9 = arith.constant 0 : index
    %c0_10 = arith.constant 0 : index
    %c0_11 = arith.constant 0 : index
    %14 = vector.load %arg5[%c0_9, %c0_10, %c0_11] : memref<1x16x64xf32, #tpu.memory_space<vmem>>, vector<1x16x64xf32>
    tpu.vector_store %arg5[%c0_9, %c0_10, %c0_11], %13 {strides = array<i32>} : memref<1x16x64xf32, #tpu.memory_space<vmem>>, vector<1x16x64xf32>,
    return
  }
  func.func @transform_0(%arg0: i32) -> (i32, i32, i32) {
    %c0_i32 = arith.constant 0 : i32
    %c0_i32_0 = arith.constant 0 : i32
    %c0_i32_1 = arith.constant 0 : i32
    return %arg0, %c0_i32, %c0_i32_0 : i32, i32, i32
  }
  func.func @transform_1(%arg0: i32) -> (i32, i32, i32) {
    %c0_i32 = arith.constant 0 : i32
    %c0_i32_0 = arith.constant 0 : i32
    %c0_i32_1 = arith.constant 0 : i32
    return %arg0, %c0_i32, %c0_i32_0 : i32, i32, i32
  }
  func.func @transform_2(%arg0: i32) -> (i32, i32) {
    %c0_i32 = arith.constant 0 : i32
    %c0_i32_0 = arith.constant 0 : i32
    %c0_i32_1 = arith.constant 0 : i32
    return %c0_i32, %c0_i32_0 : i32, i32
  }
  func.func @transform_3(%arg0: i32) -> (i32, i32) {
    %c0_i32 = arith.constant 0 : i32
    %c0_i32_0 = arith.constant 0 : i32
    %c0_i32_1 = arith.constant 0 : i32
    return %c0_i32, %c0_i32_0 : i32, i32
  }
  func.func @transform_4(%arg0: i32) -> (i32, i32, i32) {
    %c0_i32 = arith.constant 0 : i32
    %c0_i32_0 = arith.constant 0 : i32
    %c0_i32_1 = arith.constant 0 : i32
    return %arg0, %c0_i32, %c0_i32_0 : i32, i32, i32
  }
}

</mosaic_0001>

<llo_original>
// kernel: tile.28
$region0: #{tile.28}
  #allocation0 [shape = 's32[1]{0}', space=sflag, size = 0x4, scoped, tag = 'scoped memory for tile.28']
  %s0 = inlined_call_operand.vmem [shape: f32[4], index: 0, kind: input, shape index: {}]
  %s1 = inlined_call_operand.vmem [shape: f32[16,4], index: 1, kind: output, shape index: {}]
  // Predicated region
  $region2: #{tile.28} parent=0 // pred_check
    _
  $region3: #{tile.28} parent=0 // pred_check_branch
    %3 = sbr.rel (0) target = $region5
  $region4: #{tile.28} parent=0 // pred_region
    _
  $region5: #{tile.28} parent=0 // pred_fallthru
    _
  %v4 = vld [vmem:[%s0] ss:$0 sm:$0xff]
  %5 = vst [vmem:[%s1] sm:$0xff] %v4
  %s6 = scalar_lea.vmem %s1, 8
  %7 = vst [vmem:[%s6] sm:$0xff] %v4

// kernel: tile.29
$region0: #{tile.29}
  %s0 = inlined_call_operand.vmem [shape: f32[16,4], index: 0, kind: input, shape index: {}]
  %s1 = inlined_call_operand.vmem [shape: f32[1,64], index: 1, kind: output, shape index: {}]
  $region1: #{tile.29} parent=0
    #allocation0 [shape = 'u8[4096]{0}', space=vmem, size = 0x1000, scoped, tag = 'scoped mem for output reshape']
    %v2 = vld [vmem:[%s0] sm:$0x1]
    %vm3 = vcmask 31744
    %4 = vst.msk [vmem:[#allocation0] sm:$0x1] %vm3, %v2
    %s5 = scalar_lea.vmem %s0, 15
    %v6 = vld [vmem:[%s5] sm:$0x1]
    %7 = vrot.lane.b32.xlu0 %v6, 60
    %v8 = vpop.permute.xlu0 %7
    %vm9 = vcmask 523744
    %10 = vst.msk [vmem:[#allocation0] sm:$0x1] %vm9, %v8
    %s11 = scalar_lea.vmem %s0, 14
    %v12 = vld [vmem:[%s11] sm:$0x1]
    %13 = vrot.lane.b32.xlu0 %v12, 56
    %v14 = vpop.permute.xlu0 %13
    %vm15 = vcmask 490944
    %16 = vst.msk [vmem:[#allocation0] sm:$0x1] %vm15, %v14
    %s17 = scalar_lea.vmem %s0, 13
    %v18 = vld [vmem:[%s17] sm:$0x1]
    %19 = vrot.lane.b32.xlu0 %v18, 52
    %v20 = vpop.permute.xlu0 %19
    %vm21 = vcmask 458144
    %22 = vst.msk [vmem:[#allocation0] sm:$0x1] %vm21, %v20
    %s23 = scalar_lea.vmem %s0, 12
    %v24 = vld [vmem:[%s23] sm:$0x1]
    %25 = vrot.lane.b32.xlu0 %v24, 48
    %v26 = vpop.permute.xlu0 %25
    %vm27 = vcmask 425344
    %28 = vst.msk [vmem:[#allocation0] sm:$0x1] %vm27, %v26
    %s29 = scalar_lea.vmem %s0, 11
    %v30 = vld [vmem:[%s29] sm:$0x1]
    %31 = vrot.lane.b32.xlu0 %v30, 44
    %v32 = vpop.permute.xlu0 %31
    %vm33 = vcmask 392544
    %34 = vst.msk [vmem:[#allocation0] sm:$0x1] %vm33, %v32
    %s35 = scalar_lea.vmem %s0, 10
    %v36 = vld [vmem:[%s35] sm:$0x1]
    %37 = vrot.lane.b32.xlu0 %v36, 40
    %v38 = vpop.permute.xlu0 %37
    %vm39 = vcmask 359744
    %40 = vst.msk [vmem:[#allocation0] sm:$0x1] %vm39, %v38
    %s41 = scalar_lea.vmem %s0, 9
    %v42 = vld [vmem:[%s41] sm:$0x1]
    %43 = vrot.lane.b32.xlu0 %v42, 36
    %v44 = vpop.permute.xlu0 %43
    %vm45 = vcmask 326944
    %46 = vst.msk [vmem:[#allocation0] sm:$0x1] %vm45, %v44
    %s47 = scalar_lea.vmem %s0, 8
    %v48 = vld [vmem:[%s47] sm:$0x1]
    %49 = vrot.lane.b32.xlu0 %v48, 32
    %v50 = vpop.permute.xlu0 %49
    %vm51 = vcmask 294144
    %52 = vst.msk [vmem:[#allocation0] sm:$0x1] %vm51, %v50
    %s53 = scalar_lea.vmem %s0, 7
    %v54 = vld [vmem:[%s53] sm:$0x1]
    %55 = vrot.lane.b32.xlu0 %v54, 28
    %v56 = vpop.permute.xlu0 %55
    %vm57 = vcmask 261344
    %58 = vst.msk [vmem:[#allocation0] sm:$0x1] %vm57, %v56
    %s59 = scalar_lea.vmem %s0, 6
    %v60 = vld [vmem:[%s59] sm:$0x1]
    %61 = vrot.lane.b32.xlu0 %v60, 24
    %v62 = vpop.permute.xlu0 %61
    %vm63 = vcmask 228544
    %64 = vst.msk [vmem:[#allocation0] sm:$0x1] %vm63, %v62
    %s65 = scalar_lea.vmem %s0, 5
    %v66 = vld [vmem:[%s65] sm:$0x1]
    %67 = vrot.lane.b32.xlu0 %v66, 20
    %v68 = vpop.permute.xlu0 %67
    %vm69 = vcmask 195744
    %70 = vst.msk [vmem:[#allocation0] sm:$0x1] %vm69, %v68
    %s71 = scalar_lea.vmem %s0, 4
    %v72 = vld [vmem:[%s71] sm:$0x1]
    %73 = vrot.lane.b32.xlu0 %v72, 16
    %v74 = vpop.permute.xlu0 %73
    %vm75 = vcmask 162944
    %76 = vst.msk [vmem:[#allocation0] sm:$0x1] %vm75, %v74
    %s77 = scalar_lea.vmem %s0, 3
    %v78 = vld [vmem:[%s77] sm:$0x1]
    %79 = vrot.lane.b32.xlu0 %v78, 12
    %v80 = vpop.permute.xlu0 %79
    %vm81 = vcmask 130144
    %82 = vst.msk [vmem:[#allocation0] sm:$0x1] %vm81, %v80
    %s83 = scalar_lea.vmem %s0, 2
    %v84 = vld [vmem:[%s83] sm:$0x1]
    %85 = vrot.lane.b32.xlu0 %v84, 8
    %v86 = vpop.permute.xlu0 %85
    %vm87 = vcmask 97344
    %88 = vst.msk [vmem:[#allocation0] sm:$0x1] %vm87, %v86
    %s89 = scalar_lea.vmem %s0, 1
    %v90 = vld [vmem:[%s89] sm:$0x1]
    %91 = vrot.lane.b32.xlu0 %v90, 4
    %v92 = vpop.permute.xlu0 %91
    %vm93 = vcmask 64544
    %94 = vst.msk [vmem:[#allocation0] sm:$0x1] %vm93, %v92
    %s96 = sshllo.u32 0, 1
    %v98 = vld [vmem:[#allocation0] sm:%s96]
    %s99 = sshllo.u32 0, 1
    %100 = vst [vmem:[%s1] sm:%s99] %v98

// kernel: resnet_basic_block.5
$region0: #{resnet_basic_block.5}
  #allocation0 [shape = 'u32[]', space=smem, size = 0x4, offset = 0x4, fixed_abs, tag = 'smem constant byte address 0x4 - core index']
  #allocation1 [shape = 'u32[144,128]{1,0:T(1,128)}', space=vmem, size = 0x12000, scoped, tag = 'internal scratch']
  %s0 = inlined_call_operand.vmem [shape: bf16[2,16,64], index: 0, kind: input, shape index: {}]
  %s1 = inlined_call_operand.vmem [shape: f32[2,16,64], index: 1, kind: input, shape index: {}]
  %s2 = inlined_call_operand.vmem [shape: f32[1,64], index: 2, kind: input, shape index: {}]
  %s3 = inlined_call_operand.vmem [shape: f32[1,64], index: 3, kind: input, shape index: {}]
  %s4 = inlined_call_operand.vmem [shape: f32[2,16,64], index: 4, kind: output, shape index: {}]
  %s5 = sld [smem:[#allocation0]]
  $region49: #{resnet_basic_block.5} parent=0
    _
  %s7 = ssub.s32 1, %s5
  %s8 = scalar_select 0, %s7, %s5
  loop: start=0, step=1, limit=4
  $region2: #{resnet_basic_block.5} parent=0 // loop_pre_header
    _
  $region3: #{resnet_basic_block.5} parent=0 // loop_header
    %s10 = sphi 0, %s14
    %p11 = scmp.ge.s32.totalorder %s10, 4
    %s20 = sphi 0, %s22
    %s23 = sphi 0, %s20
    %s24 = sphi 0, %s23
    %s40 = sphi 0, %s24
    %s46 = sphi 0, %s48
    %s49 = sphi 0, %s46
    %s50 = sphi 0, %s49
    %s66 = sphi 0, %s50
    %s70 = sphi 0, %s70
    %s72 = sphi 0, %s70
    %s73 = sphi 0, %s72
    %s87 = sphi 0, %s73
    %s91 = sphi 0, %s91
    %s93 = sphi 0, %s91
    %s94 = sphi 0, %s93
    %s108 = sphi 0, %s94
    %s114 = sphi 0, %s116
    %s117 = sphi 0, %s114
    %s118 = sphi 0, %s117
    %s134 = sphi 0, %s118
  $region4: #{resnet_basic_block.5} parent=0 // loop_header_branch
    %13 = sbr.rel (%p11) target = $region8
  $region5: #{resnet_basic_block.5} parent=0 // loop_body
    %s15 = ssub.s32 %s10, 1
    %s16 = ssub.s32 %s10, 2
    %s17 = sadd.s32 %s10, 1
    %s18 = ssub.s32 %s10, %s17
    %p19 = scmp.eq.s32.totalorder %s18, 0
    %s21 = sadd.s32 %s20, 1
    %s22 = scalar_select %p19, %s20, %s21
    %p25 = pneg %p19
    %p26 = scmp.eq.s32.totalorder %s10, 1
    %p27 = por %p25, %p26
    %p28 = scmp.ne.s32.totalorder %s20, %s23
    %p29 = scmp.eq.s32.totalorder %s10, 0
    %p30 = por %p28, %p29
    %p31 = scmp.ne.s32.totalorder %s20, %s23
    %p32 = scmp.eq.s32.totalorder %s15, 1
    %p33 = por %p31, %p32
    %p34 = scmp.ne.s32.totalorder %s23, %s24
    %p35 = scmp.eq.s32.totalorder %s15, 0
    %p36 = por %p34, %p35
    %p37 = scmp.ne.s32.totalorder %s23, %s24
    %p38 = scmp.eq.s32.totalorder %s16, 1
    %p39 = por %p37, %p38
    %p41 = scmp.ne.s32.totalorder %s24, %s40
    %p42 = scmp.eq.s32.totalorder %s16, 0
    %p43 = por %p41, %p42
    %s44 = ssub.s32 %s10, %s17
    %p45 = scmp.eq.s32.totalorder %s44, 0
    %s47 = sadd.s32 %s46, 1
    %s48 = scalar_select %p45, %s46, %s47
    %p51 = pneg %p45
    %p52 = scmp.eq.s32.totalorder %s10, 1
    %p53 = por %p51, %p52
    %p54 = scmp.ne.s32.totalorder %s46, %s49
    %p55 = scmp.eq.s32.totalorder %s10, 0
    %p56 = por %p54, %p55
    %p57 = scmp.ne.s32.totalorder %s46, %s49
    %p58 = scmp.eq.s32.totalorder %s15, 1
    %p59 = por %p57, %p58
    %p60 = scmp.ne.s32.totalorder %s49, %s50
    %p61 = scmp.eq.s32.totalorder %s15, 0
    %p62 = por %p60, %p61
    %p63 = scmp.ne.s32.totalorder %s49, %s50
    %p64 = scmp.eq.s32.totalorder %s16, 1
    %p65 = por %p63, %p64
    %p67 = scmp.ne.s32.totalorder %s50, %s66
    %p68 = scmp.eq.s32.totalorder %s16, 0
    %p69 = por %p67, %p68
    %s71 = sadd.s32 %s70, 1
    %p74 = scmp.eq.s32.totalorder %s10, 1
    %p75 = scmp.ne.s32.totalorder %s70, %s72
    %p76 = scmp.eq.s32.totalorder %s10, 0
    %p77 = por %p75, %p76
    %p78 = scmp.ne.s32.totalorder %s70, %s72
    %p79 = scmp.eq.s32.totalorder %s15, 1
    %p80 = por %p78, %p79
    %p81 = scmp.ne.s32.totalorder %s72, %s73
    %p82 = scmp.eq.s32.totalorder %s15, 0
    %p83 = por %p81, %p82
    %p84 = scmp.ne.s32.totalorder %s72, %s73
    %p85 = scmp.eq.s32.totalorder %s16, 1
    %p86 = por %p84, %p85
    %p88 = scmp.ne.s32.totalorder %s73, %s87
    %p89 = scmp.eq.s32.totalorder %s16, 0
    %p90 = por %p88, %p89
    %s92 = sadd.s32 %s91, 1
    %p95 = scmp.eq.s32.totalorder %s10, 1
    %p96 = scmp.ne.s32.totalorder %s91, %s93
    %p97 = scmp.eq.s32.totalorder %s10, 0
    %p98 = por %p96, %p97
    %p99 = scmp.ne.s32.totalorder %s91, %s93
    %p100 = scmp.eq.s32.totalorder %s15, 1
    %p101 = por %p99, %p100
    %p102 = scmp.ne.s32.totalorder %s93, %s94
    %p103 = scmp.eq.s32.totalorder %s15, 0
    %p104 = por %p102, %p103
    %p105 = scmp.ne.s32.totalorder %s93, %s94
    %p106 = scmp.eq.s32.totalorder %s16, 1
    %p107 = por %p105, %p106
    %p109 = scmp.ne.s32.totalorder %s94, %s108
    %p110 = scmp.eq.s32.totalorder %s16, 0
    %p111 = por %p109, %p110
    %s112 = ssub.s32 %s10, %s17
    %p113 = scmp.eq.s32.totalorder %s112, 0
    %s115 = sadd.s32 %s114, 1
    %s116 = scalar_select %p113, %s114, %s115
    %p119 = pneg %p113
    %p120 = scmp.eq.s32.totalorder %s10, 1
    %p121 = por %p119, %p120
    %p122 = scmp.ne.s32.totalorder %s114, %s117
    %p123 = scmp.eq.s32.totalorder %s10, 0
    %p124 = por %p122, %p123
    %p125 = scmp.ne.s32.totalorder %s114, %s117
    %p126 = scmp.eq.s32.totalorder %s15, 1
    %p127 = por %p125, %p126
    %p128 = scmp.ne.s32.totalorder %s117, %s118
    %p129 = scmp.eq.s32.totalorder %s15, 0
    %p130 = por %p128, %p129
    %p131 = scmp.ne.s32.totalorder %s117, %s118
    %p132 = scmp.eq.s32.totalorder %s16, 1
    %p133 = por %p131, %p132
    %p135 = scmp.ne.s32.totalorder %s118, %s134
    %p136 = scmp.eq.s32.totalorder %s16, 0
    %p137 = por %p135, %p136
    %p138 = scmp.le.s32.totalorder 1, %s10
    %p139 = scmp.lt.s32.totalorder %s10, 3
    %p140 = pnand %p138, %p139
    %p141 = pneg %p140
    // Predicated region
    $region9: #{resnet_basic_block.5} parent=5 // pred_check
      _
    $region10: #{resnet_basic_block.5} parent=5 // pred_check_branch
      %143 = sbr.rel (%p140) target = $region12
    $region11: #{resnet_basic_block.5} parent=5 // pred_region
      %s144 = ssub.s32 %s10, 1
      // Predicated region
      $region13: #{resnet_basic_block.5} parent=11 // pred_check
        %p145 = pneg %p83
      $region14: #{resnet_basic_block.5} parent=11 // pred_check_branch
        %147 = sbr.rel (%p145) target = $region16
      $region15: #{resnet_basic_block.5} parent=11 // pred_region
        _
      $region16: #{resnet_basic_block.5} parent=11 // pred_fallthru
        _
      // Predicated region
      $region17: #{resnet_basic_block.5} parent=11 // pred_check
        %p148 = pneg %p104
      $region18: #{resnet_basic_block.5} parent=11 // pred_check_branch
        %150 = sbr.rel (%p148) target = $region20
      $region19: #{resnet_basic_block.5} parent=11 // pred_region
        _
      $region20: #{resnet_basic_block.5} parent=11 // pred_fallthru
        _
    $region12: #{resnet_basic_block.5} parent=5 // pred_fallthru
      _
    %p151 = scmp.lt.s32.totalorder %s10, 2
    // Predicated region
    $region21: #{resnet_basic_block.5} parent=5 // pred_check
      %p152 = pneg %p151
    $region22: #{resnet_basic_block.5} parent=5 // pred_check_branch
      %154 = sbr.rel (%p152) target = $region24
    $region23: #{resnet_basic_block.5} parent=5 // pred_region
      // Predicated region
      $region25: #{resnet_basic_block.5} parent=23 // pred_check
        %p155 = pneg %p30
      $region26: #{resnet_basic_block.5} parent=23 // pred_check_branch
        %157 = sbr.rel (%p155) target = $region28
      $region27: #{resnet_basic_block.5} parent=23 // pred_region
        %p158 = scmp.lt.s32.totalorder %s10, 1
        %s159 = scalar_select %p158, %s10, 1
        %s160 = smul.addr %s159, 2
        %s161 = smul.addr %s160, 4
        %s162 = scalar_lea.vmem %s0, %s161
      $region28: #{resnet_basic_block.5} parent=23 // pred_fallthru
        _
      // Predicated region
      $region29: #{resnet_basic_block.5} parent=23 // pred_check
        %p163 = pneg %p56
      $region30: #{resnet_basic_block.5} parent=23 // pred_check_branch
        %165 = sbr.rel (%p163) target = $region32
      $region31: #{resnet_basic_block.5} parent=23 // pred_region
        %p166 = scmp.lt.s32.totalorder %s10, 1
        %s167 = scalar_select %p166, %s10, 1
        %s168 = smul.addr %s167, 2
        %s169 = smul.addr %s168, 8
        %s170 = scalar_lea.vmem %s1, %s169
      $region32: #{resnet_basic_block.5} parent=23 // pred_fallthru
        _
    $region24: #{resnet_basic_block.5} parent=5 // pred_fallthru
      _
    %p171 = scmp.le.s32.totalorder 1, %s10
    %p172 = scmp.lt.s32.totalorder %s10, 3
    %p173 = pnand %p171, %p172
    %p174 = pneg %p173
    // Predicated region
    $region33: #{resnet_basic_block.5} parent=5 // pred_check
      _
    $region34: #{resnet_basic_block.5} parent=5 // pred_check_branch
      %176 = sbr.rel (%p173) target = $region36
    $region35: #{resnet_basic_block.5} parent=5 // pred_region
      %s177 = ssub.s32 %s10, 1
      %p178 = scmp.lt.s32.totalorder %s15, 1
      %s179 = scalar_select %p178, %s15, 1
      %s180 = smul.addr %s179, 2
      %s181 = smul.addr %s180, 4
      %s182 = scalar_lea.vmem %s0, %s181
      %p183 = pneg %p36
      %p184 = pneg %p33
      %p185 = scmp.lt.s32.totalorder %s15, 1
      %s186 = scalar_select %p185, %s15, 1
      %s187 = smul.addr %s186, 2
      %s188 = smul.addr %s187, 8
      %s189 = scalar_lea.vmem %s1, %s188
      %p190 = pneg %p62
      %p191 = pneg %p59
      %p192 = pneg %p83
      %p193 = pneg %p80
      %p194 = pneg %p104
      %p195 = pneg %p101
      %p196 = pneg %p130
      %p197 = pneg %p127
      %p198 = scmp.lt.s32.totalorder %s15, 1
      %s199 = scalar_select %p198, %s15, 1
      %s200 = smul.addr %s199, 2
      %s201 = smul.addr %s200, 8
      %s202 = scalar_lea.vmem %s4, %s201
      %p203 = scmp.lt.s32.totalorder %s15, 1
      %s204 = scalar_select %p203, %s15, 1
      %s205 = smul.addr %s204, 2
      %s206 = smul.addr %s205, 4
      %s207 = scalar_lea.vmem %s0, %s206
      %p208 = scmp.lt.s32.totalorder %s15, 1
      %s209 = scalar_select %p208, %s15, 1
      %s210 = smul.addr %s209, 2
      %s211 = smul.addr %s210, 8
      %s212 = scalar_lea.vmem %s1, %s211
      %p213 = scmp.lt.s32.totalorder %s15, 1
      %s214 = scalar_select %p213, %s15, 1
      %s215 = smul.addr %s214, 2
      %s216 = smul.addr %s215, 8
      %s217 = scalar_lea.vmem %s4, %s216
      %v218 = vld [vmem:[%s207] sm:$0xf]
      %v219 = vld [vmem:[%s207 + $0x4] sm:$0xf]
      %v220 = vunpack.c.l.bf16 %v218
      %v221 = vunpack.c.l.bf16 %v219
      %v222 = vld [vmem:[%s2] sm:$0x1]
      %v224 = vlaneseq
      %v225 = vshrl.u32 %v224, 7
      %v226 = vsub.s32 0, %v225
      %v227 = vrot.slane %v222, %v226
      %v229 = vmul.f32 %v220, %v227
      %v230 = vmul.f32 %v221, %v227
      %v231 = vld [vmem:[%s3] sm:$0x1]
      %v233 = vlaneseq
      %v234 = vshrl.u32 %v233, 7
      %v235 = vsub.s32 0, %v234
      %v236 = vrot.slane %v231, %v235
      %v238 = vadd.f32 %v229, %v236
      %v239 = vadd.f32 %v230, %v236
      %v240 = vld [vmem:[%s212] sm:$0xff]
      %v241 = vld [vmem:[%s212 + $0x8] sm:$0xff]
      %v242 = vadd.f32 %v238, %v240
      %v243 = vadd.f32 %v239, %v241
      %v244 = vmax.f32 %v242, 0.0
      %v245 = vmax.f32 %v243, 0.0
      %vm246 = vcmask 523264
      %247 = vst.msk [vmem:[%s217] sm:$0xff] %vm246, %v244
      %248 = vst.msk [vmem:[%s217 + $0x8] sm:$0xff] %vm246, %v245
      %p249 = scmp.lt.s32.totalorder %s15, 1
      %s250 = scalar_select %p249, %s15, 1
      %s251 = smul.addr %s250, 2
      %s252 = smul.addr %s251, 8
      %s253 = scalar_lea.vmem %s4, %s252
      // Predicated region
      $region37: #{resnet_basic_block.5} parent=35 // pred_check
        %p254 = pneg %p127
      $region38: #{resnet_basic_block.5} parent=35 // pred_check_branch
        %256 = sbr.rel (%p254) target = $region40
      $region39: #{resnet_basic_block.5} parent=35 // pred_region
        _
      $region40: #{resnet_basic_block.5} parent=35 // pred_fallthru
        _
    $region36: #{resnet_basic_block.5} parent=5 // pred_fallthru
      _
    %p257 = scmp.le.s32.totalorder 2, %s10
    // Predicated region
    $region41: #{resnet_basic_block.5} parent=5 // pred_check
      %p258 = pneg %p257
    $region42: #{resnet_basic_block.5} parent=5 // pred_check_branch
      %260 = sbr.rel (%p258) target = $region44
    $region43: #{resnet_basic_block.5} parent=5 // pred_region
      %s261 = ssub.s32 %s10, 2
      // Predicated region
      $region45: #{resnet_basic_block.5} parent=43 // pred_check
        %p262 = pneg %p133
      $region46: #{resnet_basic_block.5} parent=43 // pred_check_branch
        %264 = sbr.rel (%p262) target = $region48
      $region47: #{resnet_basic_block.5} parent=43 // pred_region
        %p265 = scmp.lt.s32.totalorder %s16, 1
        %s266 = scalar_select %p265, %s16, 1
        %s267 = smul.addr %s266, 2
        %s268 = smul.addr %s267, 8
        %s269 = scalar_lea.vmem %s4, %s268
      $region48: #{resnet_basic_block.5} parent=43 // pred_fallthru
        _
    $region44: #{resnet_basic_block.5} parent=5 // pred_fallthru
      _
  $region6: #{resnet_basic_block.5} parent=0 // loop_footer
    %s14 = sadd.s32 1, %s10
  $region7: #{resnet_basic_block.5} parent=0 // loop_footer_branch
    %9 = sbr.rel target = $region3
  $region8: #{resnet_basic_block.5} parent=0 // loop_exit
    _

// kernel: resnet_basic_block.3
$region0: #{resnet_basic_block.3}
  #allocation0 [shape = 'u32[]', space=smem, size = 0x4, offset = 0x4, fixed_abs, tag = 'smem constant byte address 0x4 - core index']
  #allocation1 [shape = 'u32[144,128]{1,0:T(1,128)}', space=vmem, size = 0x12000, scoped, tag = 'internal scratch']
  #allocation2 [shape = 'f32[18,64]{1,0:T(8,128)}', space=vmem, size = 0x3000, scoped, tag = 'scratch operand']
  %s0 = inlined_call_operand.vmem [shape: f32[2,16,64], index: 0, kind: input, shape index: {}]
  %s1 = inlined_call_operand.vmem [shape: bf16[3,64,64], index: 1, kind: input, shape index: {}]
  %s2 = inlined_call_operand.vmem [shape: bf16[2,16,64], index: 2, kind: output, shape index: {0}]
  %s3 = inlined_call_operand.vmem [shape: f32[2,1,64], index: 3, kind: output, shape index: {1}]
  %s4 = inlined_call_operand.vmem [shape: f32[2,1,64], index: 4, kind: output, shape index: {2}]
  %5 = xla_tuple %s2, %s3, %s4
  %s6 = sld [smem:[#allocation0]]
  $region57: #{resnet_basic_block.3} parent=0
    _
  %s8 = ssub.s32 1, %s6
  %s9 = scalar_select 0, %s8, %s6
  loop: start=0, step=1, limit=4
  $region2: #{resnet_basic_block.3} parent=0 // loop_pre_header
    _
  $region3: #{resnet_basic_block.3} parent=0 // loop_header
    %s11 = sphi 0, %s15
    %p12 = scmp.ge.s32.totalorder %s11, 4
    %s21 = sphi 0, %s23
    %s24 = sphi 0, %s21
    %s25 = sphi 0, %s24
    %s41 = sphi 0, %s25
    %s45 = sphi 0, %s45
    %s47 = sphi 0, %s45
    %s48 = sphi 0, %s47
    %s62 = sphi 0, %s48
    %s68 = sphi 0, %s70
    %s71 = sphi 0, %s68
    %s72 = sphi 0, %s71
    %s88 = sphi 0, %s72
    %s94 = sphi 0, %s96
    %s97 = sphi 0, %s94
    %s98 = sphi 0, %s97
    %s114 = sphi 0, %s98
    %s120 = sphi 0, %s122
    %s123 = sphi 0, %s120
    %s124 = sphi 0, %s123
    %s140 = sphi 0, %s124
  $region4: #{resnet_basic_block.3} parent=0 // loop_header_branch
    %14 = sbr.rel (%p12) target = $region8
  $region5: #{resnet_basic_block.3} parent=0 // loop_body
    %s16 = ssub.s32 %s11, 1
    %s17 = ssub.s32 %s11, 2
    %s18 = sadd.s32 %s11, 1
    %s19 = ssub.s32 %s11, %s18
    %p20 = scmp.eq.s32.totalorder %s19, 0
    %s22 = sadd.s32 %s21, 1
    %s23 = scalar_select %p20, %s21, %s22
    %p26 = pneg %p20
    %p27 = scmp.eq.s32.totalorder %s11, 1
    %p28 = por %p26, %p27
    %p29 = scmp.ne.s32.totalorder %s21, %s24
    %p30 = scmp.eq.s32.totalorder %s11, 0
    %p31 = por %p29, %p30
    %p32 = scmp.ne.s32.totalorder %s21, %s24
    %p33 = scmp.eq.s32.totalorder %s16, 1
    %p34 = por %p32, %p33
    %p35 = scmp.ne.s32.totalorder %s24, %s25
    %p36 = scmp.eq.s32.totalorder %s16, 0
    %p37 = por %p35, %p36
    %p38 = scmp.ne.s32.totalorder %s24, %s25
    %p39 = scmp.eq.s32.totalorder %s17, 1
    %p40 = por %p38, %p39
    %p42 = scmp.ne.s32.totalorder %s25, %s41
    %p43 = scmp.eq.s32.totalorder %s17, 0
    %p44 = por %p42, %p43
    %s46 = sadd.s32 %s45, 1
    %p49 = scmp.eq.s32.totalorder %s11, 1
    %p50 = scmp.ne.s32.totalorder %s45, %s47
    %p51 = scmp.eq.s32.totalorder %s11, 0
    %p52 = por %p50, %p51
    %p53 = scmp.ne.s32.totalorder %s45, %s47
    %p54 = scmp.eq.s32.totalorder %s16, 1
    %p55 = por %p53, %p54
    %p56 = scmp.ne.s32.totalorder %s47, %s48
    %p57 = scmp.eq.s32.totalorder %s16, 0
    %p58 = por %p56, %p57
    %p59 = scmp.ne.s32.totalorder %s47, %s48
    %p60 = scmp.eq.s32.totalorder %s17, 1
    %p61 = por %p59, %p60
    %p63 = scmp.ne.s32.totalorder %s48, %s62
    %p64 = scmp.eq.s32.totalorder %s17, 0
    %p65 = por %p63, %p64
    %s66 = ssub.s32 %s11, %s18
    %p67 = scmp.eq.s32.totalorder %s66, 0
    %s69 = sadd.s32 %s68, 1
    %s70 = scalar_select %p67, %s68, %s69
    %p73 = pneg %p67
    %p74 = scmp.eq.s32.totalorder %s11, 1
    %p75 = por %p73, %p74
    %p76 = scmp.ne.s32.totalorder %s68, %s71
    %p77 = scmp.eq.s32.totalorder %s11, 0
    %p78 = por %p76, %p77
    %p79 = scmp.ne.s32.totalorder %s68, %s71
    %p80 = scmp.eq.s32.totalorder %s16, 1
    %p81 = por %p79, %p80
    %p82 = scmp.ne.s32.totalorder %s71, %s72
    %p83 = scmp.eq.s32.totalorder %s16, 0
    %p84 = por %p82, %p83
    %p85 = scmp.ne.s32.totalorder %s71, %s72
    %p86 = scmp.eq.s32.totalorder %s17, 1
    %p87 = por %p85, %p86
    %p89 = scmp.ne.s32.totalorder %s72, %s88
    %p90 = scmp.eq.s32.totalorder %s17, 0
    %p91 = por %p89, %p90
    %s92 = ssub.s32 %s11, %s18
    %p93 = scmp.eq.s32.totalorder %s92, 0
    %s95 = sadd.s32 %s94, 1
    %s96 = scalar_select %p93, %s94, %s95
    %p99 = pneg %p93
    %p100 = scmp.eq.s32.totalorder %s11, 1
    %p101 = por %p99, %p100
    %p102 = scmp.ne.s32.totalorder %s94, %s97
    %p103 = scmp.eq.s32.totalorder %s11, 0
    %p104 = por %p102, %p103
    %p105 = scmp.ne.s32.totalorder %s94, %s97
    %p106 = scmp.eq.s32.totalorder %s16, 1
    %p107 = por %p105, %p106
    %p108 = scmp.ne.s32.totalorder %s97, %s98
    %p109 = scmp.eq.s32.totalorder %s16, 0
    %p110 = por %p108, %p109
    %p111 = scmp.ne.s32.totalorder %s97, %s98
    %p112 = scmp.eq.s32.totalorder %s17, 1
    %p113 = por %p111, %p112
    %p115 = scmp.ne.s32.totalorder %s98, %s114
    %p116 = scmp.eq.s32.totalorder %s17, 0
    %p117 = por %p115, %p116
    %s118 = ssub.s32 %s11, %s18
    %p119 = scmp.eq.s32.totalorder %s118, 0
    %s121 = sadd.s32 %s120, 1
    %s122 = scalar_select %p119, %s120, %s121
    %p125 = pneg %p119
    %p126 = scmp.eq.s32.totalorder %s11, 1
    %p127 = por %p125, %p126
    %p128 = scmp.ne.s32.totalorder %s120, %s123
    %p129 = scmp.eq.s32.totalorder %s11, 0
    %p130 = por %p128, %p129
    %p131 = scmp.ne.s32.totalorder %s120, %s123
    %p132 = scmp.eq.s32.totalorder %s16, 1
    %p133 = por %p131, %p132
    %p134 = scmp.ne.s32.totalorder %s123, %s124
    %p135 = scmp.eq.s32.totalorder %s16, 0
    %p136 = por %p134, %p135
    %p137 = scmp.ne.s32.totalorder %s123, %s124
    %p138 = scmp.eq.s32.totalorder %s17, 1
    %p139 = por %p137, %p138
    %p141 = scmp.ne.s32.totalorder %s124, %s140
    %p142 = scmp.eq.s32.totalorder %s17, 0
    %p143 = por %p141, %p142
    %p144 = scmp.le.s32.totalorder 1, %s11
    %p145 = scmp.lt.s32.totalorder %s11, 3
    %p146 = pnand %p144, %p145
    %p147 = pneg %p146
    // Predicated region
    $region9: #{resnet_basic_block.3} parent=5 // pred_check
      _
    $region10: #{resnet_basic_block.3} parent=5 // pred_check_branch
      %149 = sbr.rel (%p146) target = $region12
    $region11: #{resnet_basic_block.3} parent=5 // pred_region
      %s150 = ssub.s32 %s11, 1
      // Predicated region
      $region13: #{resnet_basic_block.3} parent=11 // pred_check
        %p151 = pneg %p58
      $region14: #{resnet_basic_block.3} parent=11 // pred_check_branch
        %153 = sbr.rel (%p151) target = $region16
      $region15: #{resnet_basic_block.3} parent=11 // pred_region
        _
      $region16: #{resnet_basic_block.3} parent=11 // pred_fallthru
        _
    $region12: #{resnet_basic_block.3} parent=5 // pred_fallthru
      _
    %p154 = scmp.lt.s32.totalorder %s11, 2
    // Predicated region
    $region17: #{resnet_basic_block.3} parent=5 // pred_check
      %p155 = pneg %p154
    $region18: #{resnet_basic_block.3} parent=5 // pred_check_branch
      %157 = sbr.rel (%p155) target = $region20
    $region19: #{resnet_basic_block.3} parent=5 // pred_region
      // Predicated region
      $region21: #{resnet_basic_block.3} parent=19 // pred_check
        %p158 = pneg %p31
      $region22: #{resnet_basic_block.3} parent=19 // pred_check_branch
        %160 = sbr.rel (%p158) target = $region24
      $region23: #{resnet_basic_block.3} parent=19 // pred_region
        %p161 = scmp.lt.s32.totalorder %s11, 1
        %s162 = scalar_select %p161, %s11, 1
        %s163 = smul.addr %s162, 2
        %s164 = smul.addr %s163, 8
        %s165 = scalar_lea.vmem %s0, %s164
      $region24: #{resnet_basic_block.3} parent=19 // pred_fallthru
        _
    $region20: #{resnet_basic_block.3} parent=5 // pred_fallthru
      _
    %p166 = scmp.le.s32.totalorder 1, %s11
    %p167 = scmp.lt.s32.totalorder %s11, 3
    %p168 = pnand %p166, %p167
    %p169 = pneg %p168
    // Predicated region
    $region25: #{resnet_basic_block.3} parent=5 // pred_check
      _
    $region26: #{resnet_basic_block.3} parent=5 // pred_check_branch
      %171 = sbr.rel (%p168) target = $region28
    $region27: #{resnet_basic_block.3} parent=5 // pred_region
      %s172 = ssub.s32 %s11, 1
      %p173 = scmp.lt.s32.totalorder %s16, 1
      %s174 = scalar_select %p173, %s16, 1
      %s175 = smul.addr %s174, 2
      %s176 = smul.addr %s175, 8
      %s177 = scalar_lea.vmem %s0, %s176
      %p178 = pneg %p37
      %p179 = pneg %p34
      %p180 = pneg %p58
      %p181 = pneg %p55
      %p182 = pneg %p84
      %p183 = pneg %p81
      %p184 = scmp.lt.s32.totalorder %s16, 1
      %s185 = scalar_select %p184, %s16, 1
      %s186 = smul.addr %s185, 2
      %s187 = smul.addr %s186, 4
      %s188 = scalar_lea.vmem %s2, %s187
      %p189 = pneg %p110
      %p190 = pneg %p107
      %p191 = scmp.lt.s32.totalorder %s16, 1
      %s192 = scalar_select %p191, %s16, 1
      %s193 = scalar_lea.vmem %s3, %s192
      %p194 = pneg %p136
      %p195 = pneg %p133
      %p196 = scmp.lt.s32.totalorder %s16, 1
      %s197 = scalar_select %p196, %s16, 1
      %s198 = scalar_lea.vmem %s4, %s197
      %p199 = scmp.lt.s32.totalorder %s16, 1
      %s200 = scalar_select %p199, %s16, 1
      %s201 = smul.addr %s200, 2
      %s202 = smul.addr %s201, 8
      %s203 = scalar_lea.vmem %s0, %s202
      %p204 = scmp.lt.s32.totalorder %s16, 1
      %s205 = scalar_select %p204, %s16, 1
      %s206 = smul.addr %s205, 2
      %s207 = smul.addr %s206, 4
      %s208 = scalar_lea.vmem %s2, %s207
      %p209 = scmp.lt.s32.totalorder %s16, 1
      %s210 = scalar_select %p209, %s16, 1
      %s211 = scalar_lea.vmem %s3, %s210
      %p212 = scmp.lt.s32.totalorder %s16, 1
      %s213 = scalar_select %p212, %s16, 1
      %s214 = scalar_lea.vmem %s4, %s213
      %v216 = vld [vmem:[%s203] sm:$0xff]
      %v217 = vld [vmem:[%s203 + $0x8] sm:$0xff]
      %vm218 = vcmask 516096
      %219 = vst.msk [vmem:[#allocation2] sm:$0x1] %vm218, 0.0
      %220 = vst.msk [vmem:[#allocation2 + $0x11] sm:$0x1] %vm218, 0.0
      %vm221 = vcmask 523264
      %222 = vst.msk [vmem:[#allocation2 + $0x1] sm:$0xff] %vm221, %v216
      %223 = vst.msk [vmem:[#allocation2 + $0x9] sm:$0xff] %vm221, %v217
      %v224 = vld [vmem:[%s1] sm:$0xf]
      %v225 = vld [vmem:[%s1 + $0x4] sm:$0xf]
      %v226 = vld [vmem:[%s1 + $0x8] sm:$0xf]
      %v227 = vld [vmem:[%s1 + $0xc] sm:$0xf]
      %v228 = vld [vmem:[%s1 + $0x10] sm:$0xf]
      %v229 = vld [vmem:[%s1 + $0x14] sm:$0xf]
      %v230 = vld [vmem:[%s1 + $0x18] sm:$0xf]
      %v231 = vld [vmem:[%s1 + $0x1c] sm:$0xf]
      %v232 = vld [vmem:[%s1 + $0x20] sm:$0xf]
      %v233 = vld [vmem:[%s1 + $0x24] sm:$0xf]
      %v234 = vld [vmem:[%s1 + $0x28] sm:$0xf]
      %v235 = vld [vmem:[%s1 + $0x2c] sm:$0xf]
      %v236 = vld [vmem:[%s1 + $0x30] sm:$0xf]
      %v237 = vld [vmem:[%s1 + $0x34] sm:$0xf]
      %v238 = vld [vmem:[%s1 + $0x38] sm:$0xf]
      %v239 = vld [vmem:[%s1 + $0x3c] sm:$0xf]
      %v240 = vld [vmem:[%s1 + $0x40] sm:$0xf]
      %v241 = vld [vmem:[%s1 + $0x44] sm:$0xf]
      %v242 = vld [vmem:[%s1 + $0x48] sm:$0xf]
      %v243 = vld [vmem:[%s1 + $0x4c] sm:$0xf]
      %v244 = vld [vmem:[%s1 + $0x50] sm:$0xf]
      %v245 = vld [vmem:[%s1 + $0x54] sm:$0xf]
      %v246 = vld [vmem:[%s1 + $0x58] sm:$0xf]
      %v247 = vld [vmem:[%s1 + $0x5c] sm:$0xf]
      %v248 = vld [vmem:[#allocation2] sm:$0xff]
      %v249 = vld [vmem:[#allocation2 + $0x8] sm:$0xff]
      %v250 = vpack.c.bf16 %v249, %v248
      %v251 = vld [vmem:[#allocation2 + $0x1] sm:$0xff]
      %v252 = vld [vmem:[#allocation2 + $0x9] sm:$0xff]
      %v253 = vpack.c.bf16 %v252, %v251
      %v262 = vunpack.c.l.b16 %v232
      %v263 = vunpack.c.l.b16 %v233
      %v264 = vunpack.c.l.b16 %v234
      %v265 = vunpack.c.l.b16 %v235
      %v266 = vunpack.c.l.b16 %v236
      %v267 = vunpack.c.l.b16 %v237
      %v268 = vunpack.c.l.b16 %v238
      %v269 = vunpack.c.l.b16 %v239
      %v270 = vpack.c.b16 %v263, %v262
      %v271 = vpack.c.b16 %v265, %v264
      %v272 = vpack.c.b16 %v267, %v266
      %v273 = vpack.c.b16 %v269, %v268
      %v279 = vsel %vm221, %v253, 0
      %281 = vmatprep.subr.bf16.mxu0 0
      %282 = vmatpush1.bf16.msra.mxu0 %v270
      %283 = vmatprep.subr.bf16.mxu0 0
      %284 = vmatpush1.bf16.msra.mxu0 %v271
      %285 = vmatprep.subr.bf16.mxu0 0
      %286 = vmatpush1.bf16.msra.mxu0 %v272
      %287 = vmatprep.subr.bf16.mxu0 0
      %288 = vmatpush1.bf16.msra.mxu0 %v273
      %289 = vmatprep.subr.bf16.mxu0 0
      %290 = vmatpush1.bf16.msra.mxu0 0
      %291 = vmatprep.subr.bf16.mxu0 0
      %292 = vmatpush1.bf16.msra.mxu0 0
      %293 = vmatprep.subr.bf16.mxu0 0
      %294 = vmatpush1.bf16.msra.mxu0 0
      %295 = vmatprep.subr.bf16.mxu0 0
      %296 = vmatpush1.bf16.msra.mxu0 0
      %297 = vmatprep.subr.bf16.mxu0 0
      %298 = vmatpush1.bf16.msra.mxu0 0
      %299 = vmatprep.subr.bf16.mxu0 0
      %300 = vmatpush1.bf16.msra.mxu0 0
      %301 = vmatprep.subr.bf16.mxu0 0
      %302 = vmatpush1.bf16.msra.mxu0 0
      %303 = vmatprep.subr.bf16.mxu0 0
      %304 = vmatpush1.bf16.msra.mxu0 0
      %305 = vmatprep.subr.bf16.mxu0 0
      %306 = vmatpush1.bf16.msra.mxu0 0
      %307 = vmatprep.subr.bf16.mxu0 0
      %308 = vmatpush1.bf16.msra.mxu0 0
      %309 = vmatprep.subr.bf16.mxu0 0
      %310 = vmatpush1.bf16.msra.mxu0 0
      %311 = vmatprep.subr.bf16.mxu0 0
      %312 = vmatpush1.bf16.msra.mxu0 0
      %313 = vmatprep.mubr.bf16.mxu0 0
      %314 = vmatmul.mubr.bf16.gmra.mrb[0].mxu0 %v279
      %v315 = vpop.f32.mrb[0].mxu0
      %v316 = vadd.f32 0.0, %v315
      %v317 = vpop.f32.mrb[0].mxu0
      %v318 = vpop.f32.mrb[0].mxu0
      %v319 = vadd.f32 0.0, %v318
      %v320 = vpop.f32.mrb[0].mxu0
      %321 = vdwg.mxu0
      %v330 = vunpack.c.l.b16 %v224
      %v331 = vunpack.c.l.b16 %v225
      %v332 = vunpack.c.l.b16 %v226
      %v333 = vunpack.c.l.b16 %v227
      %v334 = vunpack.c.l.b16 %v228
      %v335 = vunpack.c.l.b16 %v229
      %v336 = vunpack.c.l.b16 %v230
      %v337 = vunpack.c.l.b16 %v231
      %v338 = vpack.c.b16 %v331, %v330
      %v339 = vpack.c.b16 %v333, %v332
      %v340 = vpack.c.b16 %v335, %v334
      %v341 = vpack.c.b16 %v337, %v336
      %v347 = vsel %vm221, %v250, 0
      %349 = vmatprep.subr.bf16.mxu0 0
      %350 = vmatpush1.bf16.msra.mxu0 %v338
      %351 = vmatprep.subr.bf16.mxu0 0
      %352 = vmatpush1.bf16.msra.mxu0 %v339
      %353 = vmatprep.subr.bf16.mxu0 0
      %354 = vmatpush1.bf16.msra.mxu0 %v340
      %355 = vmatprep.subr.bf16.mxu0 0
      %356 = vmatpush1.bf16.msra.mxu0 %v341
      %357 = vmatprep.subr.bf16.mxu0 0
      %358 = vmatpush1.bf16.msra.mxu0 0
      %359 = vmatprep.subr.bf16.mxu0 0
      %360 = vmatpush1.bf16.msra.mxu0 0
      %361 = vmatprep.subr.bf16.mxu0 0
      %362 = vmatpush1.bf16.msra.mxu0 0
      %363 = vmatprep.subr.bf16.mxu0 0
      %364 = vmatpush1.bf16.msra.mxu0 0
      %365 = vmatprep.subr.bf16.mxu0 0
      %366 = vmatpush1.bf16.msra.mxu0 0
      %367 = vmatprep.subr.bf16.mxu0 0
      %368 = vmatpush1.bf16.msra.mxu0 0
      %369 = vmatprep.subr.bf16.mxu0 0
      %370 = vmatpush1.bf16.msra.mxu0 0
      %371 = vmatprep.subr.bf16.mxu0 0
      %372 = vmatpush1.bf16.msra.mxu0 0
      %373 = vmatprep.subr.bf16.mxu0 0
      %374 = vmatpush1.bf16.msra.mxu0 0
      %375 = vmatprep.subr.bf16.mxu0 0
      %376 = vmatpush1.bf16.msra.mxu0 0
      %377 = vmatprep.subr.bf16.mxu0 0
      %378 = vmatpush1.bf16.msra.mxu0 0
      %379 = vmatprep.subr.bf16.mxu0 0
      %380 = vmatpush1.bf16.msra.mxu0 0
      %381 = vmatprep.mubr.bf16.mxu0 0
      %382 = vmatmul.mubr.bf16.gmra.mrb[0].mxu0 %v347
      %v383 = vpop.f32.mrb[0].mxu0
      %v384 = vadd.f32 %v316, %v383
      %v385 = vpop.f32.mrb[0].mxu0
      %v386 = vpop.f32.mrb[0].mxu0
      %v387 = vadd.f32 %v319, %v386
      %v388 = vpop.f32.mrb[0].mxu0
      %389 = vdwg.mxu0
      %v390 = vld [vmem:[#allocation2 + $0x2] sm:$0xff]
      %v391 = vld [vmem:[#allocation2 + $0xa] sm:$0xff]
      %v392 = vpack.c.bf16 %v391, %v390
      %v401 = vunpack.c.l.b16 %v240
      %v402 = vunpack.c.l.b16 %v241
      %v403 = vunpack.c.l.b16 %v242
      %v404 = vunpack.c.l.b16 %v243
      %v405 = vunpack.c.l.b16 %v244
      %v406 = vunpack.c.l.b16 %v245
      %v407 = vunpack.c.l.b16 %v246
      %v408 = vunpack.c.l.b16 %v247
      %v409 = vpack.c.b16 %v402, %v401
      %v410 = vpack.c.b16 %v404, %v403
      %v411 = vpack.c.b16 %v406, %v405
      %v412 = vpack.c.b16 %v408, %v407
      %v418 = vsel %vm221, %v392, 0
      %420 = vmatprep.subr.bf16.mxu0 0
      %421 = vmatpush1.bf16.msra.mxu0 %v409
      %422 = vmatprep.subr.bf16.mxu0 0
      %423 = vmatpush1.bf16.msra.mxu0 %v410
      %424 = vmatprep.subr.bf16.mxu0 0
      %425 = vmatpush1.bf16.msra.mxu0 %v411
      %426 = vmatprep.subr.bf16.mxu0 0
      %427 = vmatpush1.bf16.msra.mxu0 %v412
      %428 = vmatprep.subr.bf16.mxu0 0
      %429 = vmatpush1.bf16.msra.mxu0 0
      %430 = vmatprep.subr.bf16.mxu0 0
      %431 = vmatpush1.bf16.msra.mxu0 0
      %432 = vmatprep.subr.bf16.mxu0 0
      %433 = vmatpush1.bf16.msra.mxu0 0
      %434 = vmatprep.subr.bf16.mxu0 0
      %435 = vmatpush1.bf16.msra.mxu0 0
      %436 = vmatprep.subr.bf16.mxu0 0
      %437 = vmatpush1.bf16.msra.mxu0 0
      %438 = vmatprep.subr.bf16.mxu0 0
      %439 = vmatpush1.bf16.msra.mxu0 0
      %440 = vmatprep.subr.bf16.mxu0 0
      %441 = vmatpush1.bf16.msra.mxu0 0
      %442 = vmatprep.subr.bf16.mxu0 0
      %443 = vmatpush1.bf16.msra.mxu0 0
      %444 = vmatprep.subr.bf16.mxu0 0
      %445 = vmatpush1.bf16.msra.mxu0 0
      %446 = vmatprep.subr.bf16.mxu0 0
      %447 = vmatpush1.bf16.msra.mxu0 0
      %448 = vmatprep.subr.bf16.mxu0 0
      %449 = vmatpush1.bf16.msra.mxu0 0
      %450 = vmatprep.subr.bf16.mxu0 0
      %451 = vmatpush1.bf16.msra.mxu0 0
      %452 = vmatprep.mubr.bf16.mxu0 0
      %453 = vmatmul.mubr.bf16.gmra.mrb[0].mxu0 %v418
      %v454 = vpop.f32.mrb[0].mxu0
      %v455 = vadd.f32 0.0, %v454
      %v456 = vpop.f32.mrb[0].mxu0
      %v457 = vpop.f32.mrb[0].mxu0
      %v458 = vadd.f32 0.0, %v457
      %v459 = vpop.f32.mrb[0].mxu0
      %460 = vdwg.mxu0
      %v461 = vadd.f32 %v384, %v455
      %v462 = vadd.f32 %v387, %v458
      %v463 = vpack.c.bf16 %v462, %v461
      %v465 = vunpack.c.l.b16 %v463
      %v466 = vunpack.c.h.b16 %v463
      %v467 = vpack.c.b16 %v465, %v465
      %v468 = vpack.c.b16 %v466, %v466
      %vm471 = vcmask 519168
      %472 = vst.msk [vmem:[%s208] sm:$0xf] %vm471, %v467
      %473 = vst.msk [vmem:[%s208 + $0x4] sm:$0xf] %vm471, %v468
      %v474 = vsel %vm221, %v461, 0.0
      %v475 = vsel %vm221, %v462, 0.0
      %v476 = vadd.f32 %v474, %v475
      %v477 = vrot.slane %v476, 4
      %v478 = vadd.f32 %v476, %v477
      %v479 = vrot.slane %v478, 2
      %v480 = vadd.f32 %v478, %v479
      %v481 = vrot.slane %v480, 1
      %v482 = vadd.f32 %v480, %v481
      %483 = vst.msk [vmem:[%s211] sm:$0x1] %vm218, %v482
      %v484 = vmul.f32 %v461, %v461
      %v485 = vmul.f32 %v462, %v462
      %v486 = vsel %vm221, %v484, 0.0
      %v487 = vsel %vm221, %v485, 0.0
      %v488 = vadd.f32 %v486, %v487
      %v489 = vrot.slane %v488, 4
      %v490 = vadd.f32 %v488, %v489
      %v491 = vrot.slane %v490, 2
      %v492 = vadd.f32 %v490, %v491
      %v493 = vrot.slane %v492, 1
      %v494 = vadd.f32 %v492, %v493
      %495 = vst.msk [vmem:[%s214] sm:$0x1] %vm218, %v494
      %p496 = scmp.lt.s32.totalorder %s16, 1
      %s497 = scalar_select %p496, %s16, 1
      %s498 = smul.addr %s497, 2
      %s499 = smul.addr %s498, 4
      %s500 = scalar_lea.vmem %s2, %s499
      %p501 = scmp.lt.s32.totalorder %s16, 1
      %s502 = scalar_select %p501, %s16, 1
      %s503 = scalar_lea.vmem %s3, %s502
      %p504 = scmp.lt.s32.totalorder %s16, 1
      %s505 = scalar_select %p504, %s16, 1
      %s506 = scalar_lea.vmem %s4, %s505
      // Predicated region
      $region29: #{resnet_basic_block.3} parent=27 // pred_check
        %p507 = pneg %p81
      $region30: #{resnet_basic_block.3} parent=27 // pred_check_branch
        %509 = sbr.rel (%p507) target = $region32
      $region31: #{resnet_basic_block.3} parent=27 // pred_region
        _
      $region32: #{resnet_basic_block.3} parent=27 // pred_fallthru
        _
      // Predicated region
      $region33: #{resnet_basic_block.3} parent=27 // pred_check
        %p510 = pneg %p107
      $region34: #{resnet_basic_block.3} parent=27 // pred_check_branch
        %512 = sbr.rel (%p510) target = $region36
      $region35: #{resnet_basic_block.3} parent=27 // pred_region
        _
      $region36: #{resnet_basic_block.3} parent=27 // pred_fallthru
        _
      // Predicated region
      $region37: #{resnet_basic_block.3} parent=27 // pred_check
        %p513 = pneg %p133
      $region38: #{resnet_basic_block.3} parent=27 // pred_check_branch
        %515 = sbr.rel (%p513) target = $region40
      $region39: #{resnet_basic_block.3} parent=27 // pred_region
        _
      $region40: #{resnet_basic_block.3} parent=27 // pred_fallthru
        _
    $region28: #{resnet_basic_block.3} parent=5 // pred_fallthru
      _
    %p516 = scmp.le.s32.totalorder 2, %s11
    // Predicated region
    $region41: #{resnet_basic_block.3} parent=5 // pred_check
      %p517 = pneg %p516
    $region42: #{resnet_basic_block.3} parent=5 // pred_check_branch
      %519 = sbr.rel (%p517) target = $region44
    $region43: #{resnet_basic_block.3} parent=5 // pred_region
      %s520 = ssub.s32 %s11, 2
      // Predicated region
      $region45: #{resnet_basic_block.3} parent=43 // pred_check
        %p521 = pneg %p87
      $region46: #{resnet_basic_block.3} parent=43 // pred_check_branch
        %523 = sbr.rel (%p521) target = $region48
      $region47: #{resnet_basic_block.3} parent=43 // pred_region
        %p524 = scmp.lt.s32.totalorder %s17, 1
        %s525 = scalar_select %p524, %s17, 1
        %s526 = smul.addr %s525, 2
        %s527 = smul.addr %s526, 4
        %s528 = scalar_lea.vmem %s2, %s527
      $region48: #{resnet_basic_block.3} parent=43 // pred_fallthru
        _
      // Predicated region
      $region49: #{resnet_basic_block.3} parent=43 // pred_check
        %p529 = pneg %p113
      $region50: #{resnet_basic_block.3} parent=43 // pred_check_branch
        %531 = sbr.rel (%p529) target = $region52
      $region51: #{resnet_basic_block.3} parent=43 // pred_region
        %p532 = scmp.lt.s32.totalorder %s17, 1
        %s533 = scalar_select %p532, %s17, 1
        %s534 = scalar_lea.vmem %s3, %s533
      $region52: #{resnet_basic_block.3} parent=43 // pred_fallthru
        _
      // Predicated region
      $region53: #{resnet_basic_block.3} parent=43 // pred_check
        %p535 = pneg %p139
      $region54: #{resnet_basic_block.3} parent=43 // pred_check_branch
        %537 = sbr.rel (%p535) target = $region56
      $region55: #{resnet_basic_block.3} parent=43 // pred_region
        %p538 = scmp.lt.s32.totalorder %s17, 1
        %s539 = scalar_select %p538, %s17, 1
        %s540 = scalar_lea.vmem %s4, %s539
      $region56: #{resnet_basic_block.3} parent=43 // pred_fallthru
        _
    $region44: #{resnet_basic_block.3} parent=5 // pred_fallthru
      _
  $region6: #{resnet_basic_block.3} parent=0 // loop_footer
    %s15 = sadd.s32 1, %s11
  $region7: #{resnet_basic_block.3} parent=0 // loop_footer_branch
    %10 = sbr.rel target = $region3
  $region8: #{resnet_basic_block.3} parent=0 // loop_exit
    _

// kernel: resnet_basic_block.4
$region0: #{resnet_basic_block.4}
  #allocation0 [shape = 'u32[]', space=smem, size = 0x4, offset = 0x4, fixed_abs, tag = 'smem constant byte address 0x4 - core index']
  #allocation1 [shape = 'u32[144,128]{1,0:T(1,128)}', space=vmem, size = 0x12000, scoped, tag = 'internal scratch']
  #allocation2 [shape = 'f32[18,64]{1,0:T(8,128)}', space=vmem, size = 0x3000, scoped, tag = 'scratch operand']
  %s0 = inlined_call_operand.vmem [shape: bf16[2,16,64], index: 0, kind: input, shape index: {}]
  %s1 = inlined_call_operand.vmem [shape: f32[1,64], index: 1, kind: input, shape index: {}]
  %s2 = inlined_call_operand.vmem [shape: f32[1,64], index: 2, kind: input, shape index: {}]
  %s3 = inlined_call_operand.vmem [shape: bf16[3,64,64], index: 3, kind: input, shape index: {}]
  %s4 = inlined_call_operand.vmem [shape: bf16[2,16,64], index: 4, kind: output, shape index: {0}]
  %s5 = inlined_call_operand.vmem [shape: f32[2,1,64], index: 5, kind: output, shape index: {1}]
  %s6 = inlined_call_operand.vmem [shape: f32[2,1,64], index: 6, kind: output, shape index: {2}]
  %7 = xla_tuple %s4, %s5, %s6
  %s8 = sld [smem:[#allocation0]]
  $region65: #{resnet_basic_block.4} parent=0
    _
  %s10 = ssub.s32 1, %s8
  %s11 = scalar_select 0, %s10, %s8
  loop: start=0, step=1, limit=4
  $region2: #{resnet_basic_block.4} parent=0 // loop_pre_header
    _
  $region3: #{resnet_basic_block.4} parent=0 // loop_header
    %s13 = sphi 0, %s17
    %p14 = scmp.ge.s32.totalorder %s13, 4
    %s23 = sphi 0, %s25
    %s26 = sphi 0, %s23
    %s27 = sphi 0, %s26
    %s43 = sphi 0, %s27
    %s47 = sphi 0, %s47
    %s49 = sphi 0, %s47
    %s50 = sphi 0, %s49
    %s64 = sphi 0, %s50
    %s68 = sphi 0, %s68
    %s70 = sphi 0, %s68
    %s71 = sphi 0, %s70
    %s85 = sphi 0, %s71
    %s89 = sphi 0, %s89
    %s91 = sphi 0, %s89
    %s92 = sphi 0, %s91
    %s106 = sphi 0, %s92
    %s112 = sphi 0, %s114
    %s115 = sphi 0, %s112
    %s116 = sphi 0, %s115
    %s132 = sphi 0, %s116
    %s138 = sphi 0, %s140
    %s141 = sphi 0, %s138
    %s142 = sphi 0, %s141
    %s158 = sphi 0, %s142
    %s164 = sphi 0, %s166
    %s167 = sphi 0, %s164
    %s168 = sphi 0, %s167
    %s184 = sphi 0, %s168
  $region4: #{resnet_basic_block.4} parent=0 // loop_header_branch
    %16 = sbr.rel (%p14) target = $region8
  $region5: #{resnet_basic_block.4} parent=0 // loop_body
    %s18 = ssub.s32 %s13, 1
    %s19 = ssub.s32 %s13, 2
    %s20 = sadd.s32 %s13, 1
    %s21 = ssub.s32 %s13, %s20
    %p22 = scmp.eq.s32.totalorder %s21, 0
    %s24 = sadd.s32 %s23, 1
    %s25 = scalar_select %p22, %s23, %s24
    %p28 = pneg %p22
    %p29 = scmp.eq.s32.totalorder %s13, 1
    %p30 = por %p28, %p29
    %p31 = scmp.ne.s32.totalorder %s23, %s26
    %p32 = scmp.eq.s32.totalorder %s13, 0
    %p33 = por %p31, %p32
    %p34 = scmp.ne.s32.totalorder %s23, %s26
    %p35 = scmp.eq.s32.totalorder %s18, 1
    %p36 = por %p34, %p35
    %p37 = scmp.ne.s32.totalorder %s26, %s27
    %p38 = scmp.eq.s32.totalorder %s18, 0
    %p39 = por %p37, %p38
    %p40 = scmp.ne.s32.totalorder %s26, %s27
    %p41 = scmp.eq.s32.totalorder %s19, 1
    %p42 = por %p40, %p41
    %p44 = scmp.ne.s32.totalorder %s27, %s43
    %p45 = scmp.eq.s32.totalorder %s19, 0
    %p46 = por %p44, %p45
    %s48 = sadd.s32 %s47, 1
    %p51 = scmp.eq.s32.totalorder %s13, 1
    %p52 = scmp.ne.s32.totalorder %s47, %s49
    %p53 = scmp.eq.s32.totalorder %s13, 0
    %p54 = por %p52, %p53
    %p55 = scmp.ne.s32.totalorder %s47, %s49
    %p56 = scmp.eq.s32.totalorder %s18, 1
    %p57 = por %p55, %p56
    %p58 = scmp.ne.s32.totalorder %s49, %s50
    %p59 = scmp.eq.s32.totalorder %s18, 0
    %p60 = por %p58, %p59
    %p61 = scmp.ne.s32.totalorder %s49, %s50
    %p62 = scmp.eq.s32.totalorder %s19, 1
    %p63 = por %p61, %p62
    %p65 = scmp.ne.s32.totalorder %s50, %s64
    %p66 = scmp.eq.s32.totalorder %s19, 0
    %p67 = por %p65, %p66
    %s69 = sadd.s32 %s68, 1
    %p72 = scmp.eq.s32.totalorder %s13, 1
    %p73 = scmp.ne.s32.totalorder %s68, %s70
    %p74 = scmp.eq.s32.totalorder %s13, 0
    %p75 = por %p73, %p74
    %p76 = scmp.ne.s32.totalorder %s68, %s70
    %p77 = scmp.eq.s32.totalorder %s18, 1
    %p78 = por %p76, %p77
    %p79 = scmp.ne.s32.totalorder %s70, %s71
    %p80 = scmp.eq.s32.totalorder %s18, 0
    %p81 = por %p79, %p80
    %p82 = scmp.ne.s32.totalorder %s70, %s71
    %p83 = scmp.eq.s32.totalorder %s19, 1
    %p84 = por %p82, %p83
    %p86 = scmp.ne.s32.totalorder %s71, %s85
    %p87 = scmp.eq.s32.totalorder %s19, 0
    %p88 = por %p86, %p87
    %s90 = sadd.s32 %s89, 1
    %p93 = scmp.eq.s32.totalorder %s13, 1
    %p94 = scmp.ne.s32.totalorder %s89, %s91
    %p95 = scmp.eq.s32.totalorder %s13, 0
    %p96 = por %p94, %p95
    %p97 = scmp.ne.s32.totalorder %s89, %s91
    %p98 = scmp.eq.s32.totalorder %s18, 1
    %p99 = por %p97, %p98
    %p100 = scmp.ne.s32.totalorder %s91, %s92
    %p101 = scmp.eq.s32.totalorder %s18, 0
    %p102 = por %p100, %p101
    %p103 = scmp.ne.s32.totalorder %s91, %s92
    %p104 = scmp.eq.s32.totalorder %s19, 1
    %p105 = por %p103, %p104
    %p107 = scmp.ne.s32.totalorder %s92, %s106
    %p108 = scmp.eq.s32.totalorder %s19, 0
    %p109 = por %p107, %p108
    %s110 = ssub.s32 %s13, %s20
    %p111 = scmp.eq.s32.totalorder %s110, 0
    %s113 = sadd.s32 %s112, 1
    %s114 = scalar_select %p111, %s112, %s113
    %p117 = pneg %p111
    %p118 = scmp.eq.s32.totalorder %s13, 1
    %p119 = por %p117, %p118
    %p120 = scmp.ne.s32.totalorder %s112, %s115
    %p121 = scmp.eq.s32.totalorder %s13, 0
    %p122 = por %p120, %p121
    %p123 = scmp.ne.s32.totalorder %s112, %s115
    %p124 = scmp.eq.s32.totalorder %s18, 1
    %p125 = por %p123, %p124
    %p126 = scmp.ne.s32.totalorder %s115, %s116
    %p127 = scmp.eq.s32.totalorder %s18, 0
    %p128 = por %p126, %p127
    %p129 = scmp.ne.s32.totalorder %s115, %s116
    %p130 = scmp.eq.s32.totalorder %s19, 1
    %p131 = por %p129, %p130
    %p133 = scmp.ne.s32.totalorder %s116, %s132
    %p134 = scmp.eq.s32.totalorder %s19, 0
    %p135 = por %p133, %p134
    %s136 = ssub.s32 %s13, %s20
    %p137 = scmp.eq.s32.totalorder %s136, 0
    %s139 = sadd.s32 %s138, 1
    %s140 = scalar_select %p137, %s138, %s139
    %p143 = pneg %p137
    %p144 = scmp.eq.s32.totalorder %s13, 1
    %p145 = por %p143, %p144
    %p146 = scmp.ne.s32.totalorder %s138, %s141
    %p147 = scmp.eq.s32.totalorder %s13, 0
    %p148 = por %p146, %p147
    %p149 = scmp.ne.s32.totalorder %s138, %s141
    %p150 = scmp.eq.s32.totalorder %s18, 1
    %p151 = por %p149, %p150
    %p152 = scmp.ne.s32.totalorder %s141, %s142
    %p153 = scmp.eq.s32.totalorder %s18, 0
    %p154 = por %p152, %p153
    %p155 = scmp.ne.s32.totalorder %s141, %s142
    %p156 = scmp.eq.s32.totalorder %s19, 1
    %p157 = por %p155, %p156
    %p159 = scmp.ne.s32.totalorder %s142, %s158
    %p160 = scmp.eq.s32.totalorder %s19, 0
    %p161 = por %p159, %p160
    %s162 = ssub.s32 %s13, %s20
    %p163 = scmp.eq.s32.totalorder %s162, 0
    %s165 = sadd.s32 %s164, 1
    %s166 = scalar_select %p163, %s164, %s165
    %p169 = pneg %p163
    %p170 = scmp.eq.s32.totalorder %s13, 1
    %p171 = por %p169, %p170
    %p172 = scmp.ne.s32.totalorder %s164, %s167
    %p173 = scmp.eq.s32.totalorder %s13, 0
    %p174 = por %p172, %p173
    %p175 = scmp.ne.s32.totalorder %s164, %s167
    %p176 = scmp.eq.s32.totalorder %s18, 1
    %p177 = por %p175, %p176
    %p178 = scmp.ne.s32.totalorder %s167, %s168
    %p179 = scmp.eq.s32.totalorder %s18, 0
    %p180 = por %p178, %p179
    %p181 = scmp.ne.s32.totalorder %s167, %s168
    %p182 = scmp.eq.s32.totalorder %s19, 1
    %p183 = por %p181, %p182
    %p185 = scmp.ne.s32.totalorder %s168, %s184
    %p186 = scmp.eq.s32.totalorder %s19, 0
    %p187 = por %p185, %p186
    %p188 = scmp.le.s32.totalorder 1, %s13
    %p189 = scmp.lt.s32.totalorder %s13, 3
    %p190 = pnand %p188, %p189
    %p191 = pneg %p190
    // Predicated region
    $region9: #{resnet_basic_block.4} parent=5 // pred_check
      _
    $region10: #{resnet_basic_block.4} parent=5 // pred_check_branch
      %193 = sbr.rel (%p190) target = $region12
    $region11: #{resnet_basic_block.4} parent=5 // pred_region
      %s194 = ssub.s32 %s13, 1
      // Predicated region
      $region13: #{resnet_basic_block.4} parent=11 // pred_check
        %p195 = pneg %p60
      $region14: #{resnet_basic_block.4} parent=11 // pred_check_branch
        %197 = sbr.rel (%p195) target = $region16
      $region15: #{resnet_basic_block.4} parent=11 // pred_region
        _
      $region16: #{resnet_basic_block.4} parent=11 // pred_fallthru
        _
      // Predicated region
      $region17: #{resnet_basic_block.4} parent=11 // pred_check
        %p198 = pneg %p81
      $region18: #{resnet_basic_block.4} parent=11 // pred_check_branch
        %200 = sbr.rel (%p198) target = $region20
      $region19: #{resnet_basic_block.4} parent=11 // pred_region
        _
      $region20: #{resnet_basic_block.4} parent=11 // pred_fallthru
        _
      // Predicated region
      $region21: #{resnet_basic_block.4} parent=11 // pred_check
        %p201 = pneg %p102
      $region22: #{resnet_basic_block.4} parent=11 // pred_check_branch
        %203 = sbr.rel (%p201) target = $region24
      $region23: #{resnet_basic_block.4} parent=11 // pred_region
        _
      $region24: #{resnet_basic_block.4} parent=11 // pred_fallthru
        _
    $region12: #{resnet_basic_block.4} parent=5 // pred_fallthru
      _
    %p204 = scmp.lt.s32.totalorder %s13, 2
    // Predicated region
    $region25: #{resnet_basic_block.4} parent=5 // pred_check
      %p205 = pneg %p204
    $region26: #{resnet_basic_block.4} parent=5 // pred_check_branch
      %207 = sbr.rel (%p205) target = $region28
    $region27: #{resnet_basic_block.4} parent=5 // pred_region
      // Predicated region
      $region29: #{resnet_basic_block.4} parent=27 // pred_check
        %p208 = pneg %p33
      $region30: #{resnet_basic_block.4} parent=27 // pred_check_branch
        %210 = sbr.rel (%p208) target = $region32
      $region31: #{resnet_basic_block.4} parent=27 // pred_region
        %p211 = scmp.lt.s32.totalorder %s13, 1
        %s212 = scalar_select %p211, %s13, 1
        %s213 = smul.addr %s212, 2
        %s214 = smul.addr %s213, 4
        %s215 = scalar_lea.vmem %s0, %s214
      $region32: #{resnet_basic_block.4} parent=27 // pred_fallthru
        _
    $region28: #{resnet_basic_block.4} parent=5 // pred_fallthru
      _
    %p216 = scmp.le.s32.totalorder 1, %s13
    %p217 = scmp.lt.s32.totalorder %s13, 3
    %p218 = pnand %p216, %p217
    %p219 = pneg %p218
    // Predicated region
    $region33: #{resnet_basic_block.4} parent=5 // pred_check
      _
    $region34: #{resnet_basic_block.4} parent=5 // pred_check_branch
      %221 = sbr.rel (%p218) target = $region36
    $region35: #{resnet_basic_block.4} parent=5 // pred_region
      %s222 = ssub.s32 %s13, 1
      %p223 = scmp.lt.s32.totalorder %s18, 1
      %s224 = scalar_select %p223, %s18, 1
      %s225 = smul.addr %s224, 2
      %s226 = smul.addr %s225, 4
      %s227 = scalar_lea.vmem %s0, %s226
      %p228 = pneg %p39
      %p229 = pneg %p36
      %p230 = pneg %p60
      %p231 = pneg %p57
      %p232 = pneg %p81
      %p233 = pneg %p78
      %p234 = pneg %p102
      %p235 = pneg %p99
      %p236 = pneg %p128
      %p237 = pneg %p125
      %p238 = scmp.lt.s32.totalorder %s18, 1
      %s239 = scalar_select %p238, %s18, 1
      %s240 = smul.addr %s239, 2
      %s241 = smul.addr %s240, 4
      %s242 = scalar_lea.vmem %s4, %s241
      %p243 = pneg %p154
      %p244 = pneg %p151
      %p245 = scmp.lt.s32.totalorder %s18, 1
      %s246 = scalar_select %p245, %s18, 1
      %s247 = scalar_lea.vmem %s5, %s246
      %p248 = pneg %p180
      %p249 = pneg %p177
      %p250 = scmp.lt.s32.totalorder %s18, 1
      %s251 = scalar_select %p250, %s18, 1
      %s252 = scalar_lea.vmem %s6, %s251
      %p253 = scmp.lt.s32.totalorder %s18, 1
      %s254 = scalar_select %p253, %s18, 1
      %s255 = smul.addr %s254, 2
      %s256 = smul.addr %s255, 4
      %s257 = scalar_lea.vmem %s0, %s256
      %p258 = scmp.lt.s32.totalorder %s18, 1
      %s259 = scalar_select %p258, %s18, 1
      %s260 = smul.addr %s259, 2
      %s261 = smul.addr %s260, 4
      %s262 = scalar_lea.vmem %s4, %s261
      %p263 = scmp.lt.s32.totalorder %s18, 1
      %s264 = scalar_select %p263, %s18, 1
      %s265 = scalar_lea.vmem %s5, %s264
      %p266 = scmp.lt.s32.totalorder %s18, 1
      %s267 = scalar_select %p266, %s18, 1
      %s268 = scalar_lea.vmem %s6, %s267
      %v270 = vld [vmem:[%s257] sm:$0xf]
      %v271 = vld [vmem:[%s257 + $0x4] sm:$0xf]
      %v272 = vunpack.c.l.bf16 %v270
      %v273 = vunpack.c.l.bf16 %v271
      %v274 = vld [vmem:[%s1] sm:$0x1]
      %v276 = vlaneseq
      %v277 = vshrl.u32 %v276, 7
      %v278 = vsub.s32 0, %v277
      %v279 = vrot.slane %v274, %v278
      %v281 = vmul.f32 %v272, %v279
      %v282 = vmul.f32 %v273, %v279
      %v283 = vld [vmem:[%s2] sm:$0x1]
      %v285 = vlaneseq
      %v286 = vshrl.u32 %v285, 7
      %v287 = vsub.s32 0, %v286
      %v288 = vrot.slane %v283, %v287
      %v290 = vadd.f32 %v281, %v288
      %v291 = vadd.f32 %v282, %v288
      %v292 = vmax.f32 %v290, 0.0
      %v293 = vmax.f32 %v291, 0.0
      %vm294 = vcmask 516096
      %295 = vst.msk [vmem:[#allocation2] sm:$0x1] %vm294, 0.0
      %296 = vst.msk [vmem:[#allocation2 + $0x11] sm:$0x1] %vm294, 0.0
      %vm297 = vcmask 523264
      %298 = vst.msk [vmem:[#allocation2 + $0x1] sm:$0xff] %vm297, %v292
      %299 = vst.msk [vmem:[#allocation2 + $0x9] sm:$0xff] %vm297, %v293
      %v300 = vld [vmem:[%s3] sm:$0xf]
      %v301 = vld [vmem:[%s3 + $0x4] sm:$0xf]
      %v302 = vld [vmem:[%s3 + $0x8] sm:$0xf]
      %v303 = vld [vmem:[%s3 + $0xc] sm:$0xf]
      %v304 = vld [vmem:[%s3 + $0x10] sm:$0xf]
      %v305 = vld [vmem:[%s3 + $0x14] sm:$0xf]
      %v306 = vld [vmem:[%s3 + $0x18] sm:$0xf]
      %v307 = vld [vmem:[%s3 + $0x1c] sm:$0xf]
      %v308 = vld [vmem:[%s3 + $0x20] sm:$0xf]
      %v309 = vld [vmem:[%s3 + $0x24] sm:$0xf]
      %v310 = vld [vmem:[%s3 + $0x28] sm:$0xf]
      %v311 = vld [vmem:[%s3 + $0x2c] sm:$0xf]
      %v312 = vld [vmem:[%s3 + $0x30] sm:$0xf]
      %v313 = vld [vmem:[%s3 + $0x34] sm:$0xf]
      %v314 = vld [vmem:[%s3 + $0x38] sm:$0xf]
      %v315 = vld [vmem:[%s3 + $0x3c] sm:$0xf]
      %v316 = vld [vmem:[%s3 + $0x40] sm:$0xf]
      %v317 = vld [vmem:[%s3 + $0x44] sm:$0xf]
      %v318 = vld [vmem:[%s3 + $0x48] sm:$0xf]
      %v319 = vld [vmem:[%s3 + $0x4c] sm:$0xf]
      %v320 = vld [vmem:[%s3 + $0x50] sm:$0xf]
      %v321 = vld [vmem:[%s3 + $0x54] sm:$0xf]
      %v322 = vld [vmem:[%s3 + $0x58] sm:$0xf]
      %v323 = vld [vmem:[%s3 + $0x5c] sm:$0xf]
      %v324 = vld [vmem:[#allocation2] sm:$0xff]
      %v325 = vld [vmem:[#allocation2 + $0x8] sm:$0xff]
      %v326 = vpack.c.bf16 %v325, %v324
      %v327 = vld [vmem:[#allocation2 + $0x1] sm:$0xff]
      %v328 = vld [vmem:[#allocation2 + $0x9] sm:$0xff]
      %v329 = vpack.c.bf16 %v328, %v327
      %v338 = vunpack.c.l.b16 %v308
      %v339 = vunpack.c.l.b16 %v309
      %v340 = vunpack.c.l.b16 %v310
      %v341 = vunpack.c.l.b16 %v311
      %v342 = vunpack.c.l.b16 %v312
      %v343 = vunpack.c.l.b16 %v313
      %v344 = vunpack.c.l.b16 %v314
      %v345 = vunpack.c.l.b16 %v315
      %v346 = vpack.c.b16 %v339, %v338
      %v347 = vpack.c.b16 %v341, %v340
      %v348 = vpack.c.b16 %v343, %v342
      %v349 = vpack.c.b16 %v345, %v344
      %v355 = vsel %vm297, %v329, 0
      %357 = vmatprep.subr.bf16.mxu0 0
      %358 = vmatpush1.bf16.msra.mxu0 %v346
      %359 = vmatprep.subr.bf16.mxu0 0
      %360 = vmatpush1.bf16.msra.mxu0 %v347
      %361 = vmatprep.subr.bf16.mxu0 0
      %362 = vmatpush1.bf16.msra.mxu0 %v348
      %363 = vmatprep.subr.bf16.mxu0 0
      %364 = vmatpush1.bf16.msra.mxu0 %v349
      %365 = vmatprep.subr.bf16.mxu0 0
      %366 = vmatpush1.bf16.msra.mxu0 0
      %367 = vmatprep.subr.bf16.mxu0 0
      %368 = vmatpush1.bf16.msra.mxu0 0
      %369 = vmatprep.subr.bf16.mxu0 0
      %370 = vmatpush1.bf16.msra.mxu0 0
      %371 = vmatprep.subr.bf16.mxu0 0
      %372 = vmatpush1.bf16.msra.mxu0 0
      %373 = vmatprep.subr.bf16.mxu0 0
      %374 = vmatpush1.bf16.msra.mxu0 0
      %375 = vmatprep.subr.bf16.mxu0 0
      %376 = vmatpush1.bf16.msra.mxu0 0
      %377 = vmatprep.subr.bf16.mxu0 0
      %378 = vmatpush1.bf16.msra.mxu0 0
      %379 = vmatprep.subr.bf16.mxu0 0
      %380 = vmatpush1.bf16.msra.mxu0 0
      %381 = vmatprep.subr.bf16.mxu0 0
      %382 = vmatpush1.bf16.msra.mxu0 0
      %383 = vmatprep.subr.bf16.mxu0 0
      %384 = vmatpush1.bf16.msra.mxu0 0
      %385 = vmatprep.subr.bf16.mxu0 0
      %386 = vmatpush1.bf16.msra.mxu0 0
      %387 = vmatprep.subr.bf16.mxu0 0
      %388 = vmatpush1.bf16.msra.mxu0 0
      %389 = vmatprep.mubr.bf16.mxu0 0
      %390 = vmatmul.mubr.bf16.gmra.mrb[0].mxu0 %v355
      %v391 = vpop.f32.mrb[0].mxu0
      %v392 = vadd.f32 0.0, %v391
      %v393 = vpop.f32.mrb[0].mxu0
      %v394 = vpop.f32.mrb[0].mxu0
      %v395 = vadd.f32 0.0, %v394
      %v396 = vpop.f32.mrb[0].mxu0
      %397 = vdwg.mxu0
      %v406 = vunpack.c.l.b16 %v300
      %v407 = vunpack.c.l.b16 %v301
      %v408 = vunpack.c.l.b16 %v302
      %v409 = vunpack.c.l.b16 %v303
      %v410 = vunpack.c.l.b16 %v304
      %v411 = vunpack.c.l.b16 %v305
      %v412 = vunpack.c.l.b16 %v306
      %v413 = vunpack.c.l.b16 %v307
      %v414 = vpack.c.b16 %v407, %v406
      %v415 = vpack.c.b16 %v409, %v408
      %v416 = vpack.c.b16 %v411, %v410
      %v417 = vpack.c.b16 %v413, %v412
      %v423 = vsel %vm297, %v326, 0
      %425 = vmatprep.subr.bf16.mxu0 0
      %426 = vmatpush1.bf16.msra.mxu0 %v414
      %427 = vmatprep.subr.bf16.mxu0 0
      %428 = vmatpush1.bf16.msra.mxu0 %v415
      %429 = vmatprep.subr.bf16.mxu0 0
      %430 = vmatpush1.bf16.msra.mxu0 %v416
      %431 = vmatprep.subr.bf16.mxu0 0
      %432 = vmatpush1.bf16.msra.mxu0 %v417
      %433 = vmatprep.subr.bf16.mxu0 0
      %434 = vmatpush1.bf16.msra.mxu0 0
      %435 = vmatprep.subr.bf16.mxu0 0
      %436 = vmatpush1.bf16.msra.mxu0 0
      %437 = vmatprep.subr.bf16.mxu0 0
      %438 = vmatpush1.bf16.msra.mxu0 0
      %439 = vmatprep.subr.bf16.mxu0 0
      %440 = vmatpush1.bf16.msra.mxu0 0
      %441 = vmatprep.subr.bf16.mxu0 0
      %442 = vmatpush1.bf16.msra.mxu0 0
      %443 = vmatprep.subr.bf16.mxu0 0
      %444 = vmatpush1.bf16.msra.mxu0 0
      %445 = vmatprep.subr.bf16.mxu0 0
      %446 = vmatpush1.bf16.msra.mxu0 0
      %447 = vmatprep.subr.bf16.mxu0 0
      %448 = vmatpush1.bf16.msra.mxu0 0
      %449 = vmatprep.subr.bf16.mxu0 0
      %450 = vmatpush1.bf16.msra.mxu0 0
      %451 = vmatprep.subr.bf16.mxu0 0
      %452 = vmatpush1.bf16.msra.mxu0 0
      %453 = vmatprep.subr.bf16.mxu0 0
      %454 = vmatpush1.bf16.msra.mxu0 0
      %455 = vmatprep.subr.bf16.mxu0 0
      %456 = vmatpush1.bf16.msra.mxu0 0
      %457 = vmatprep.mubr.bf16.mxu0 0
      %458 = vmatmul.mubr.bf16.gmra.mrb[0].mxu0 %v423
      %v459 = vpop.f32.mrb[0].mxu0
      %v460 = vadd.f32 %v392, %v459
      %v461 = vpop.f32.mrb[0].mxu0
      %v462 = vpop.f32.mrb[0].mxu0
      %v463 = vadd.f32 %v395, %v462
      %v464 = vpop.f32.mrb[0].mxu0
      %465 = vdwg.mxu0
      %v466 = vld [vmem:[#allocation2 + $0x2] sm:$0xff]
      %v467 = vld [vmem:[#allocation2 + $0xa] sm:$0xff]
      %v468 = vpack.c.bf16 %v467, %v466
      %v477 = vunpack.c.l.b16 %v316
      %v478 = vunpack.c.l.b16 %v317
      %v479 = vunpack.c.l.b16 %v318
      %v480 = vunpack.c.l.b16 %v319
      %v481 = vunpack.c.l.b16 %v320
      %v482 = vunpack.c.l.b16 %v321
      %v483 = vunpack.c.l.b16 %v322
      %v484 = vunpack.c.l.b16 %v323
      %v485 = vpack.c.b16 %v478, %v477
      %v486 = vpack.c.b16 %v480, %v479
      %v487 = vpack.c.b16 %v482, %v481
      %v488 = vpack.c.b16 %v484, %v483
      %v494 = vsel %vm297, %v468, 0
      %496 = vmatprep.subr.bf16.mxu0 0
      %497 = vmatpush1.bf16.msra.mxu0 %v485
      %498 = vmatprep.subr.bf16.mxu0 0
      %499 = vmatpush1.bf16.msra.mxu0 %v486
      %500 = vmatprep.subr.bf16.mxu0 0
      %501 = vmatpush1.bf16.msra.mxu0 %v487
      %502 = vmatprep.subr.bf16.mxu0 0
      %503 = vmatpush1.bf16.msra.mxu0 %v488
      %504 = vmatprep.subr.bf16.mxu0 0
      %505 = vmatpush1.bf16.msra.mxu0 0
      %506 = vmatprep.subr.bf16.mxu0 0
      %507 = vmatpush1.bf16.msra.mxu0 0
      %508 = vmatprep.subr.bf16.mxu0 0
      %509 = vmatpush1.bf16.msra.mxu0 0
      %510 = vmatprep.subr.bf16.mxu0 0
      %511 = vmatpush1.bf16.msra.mxu0 0
      %512 = vmatprep.subr.bf16.mxu0 0
      %513 = vmatpush1.bf16.msra.mxu0 0
      %514 = vmatprep.subr.bf16.mxu0 0
      %515 = vmatpush1.bf16.msra.mxu0 0
      %516 = vmatprep.subr.bf16.mxu0 0
      %517 = vmatpush1.bf16.msra.mxu0 0
      %518 = vmatprep.subr.bf16.mxu0 0
      %519 = vmatpush1.bf16.msra.mxu0 0
      %520 = vmatprep.subr.bf16.mxu0 0
      %521 = vmatpush1.bf16.msra.mxu0 0
      %522 = vmatprep.subr.bf16.mxu0 0
      %523 = vmatpush1.bf16.msra.mxu0 0
      %524 = vmatprep.subr.bf16.mxu0 0
      %525 = vmatpush1.bf16.msra.mxu0 0
      %526 = vmatprep.subr.bf16.mxu0 0
      %527 = vmatpush1.bf16.msra.mxu0 0
      %528 = vmatprep.mubr.bf16.mxu0 0
      %529 = vmatmul.mubr.bf16.gmra.mrb[0].mxu0 %v494
      %v530 = vpop.f32.mrb[0].mxu0
      %v531 = vadd.f32 0.0, %v530
      %v532 = vpop.f32.mrb[0].mxu0
      %v533 = vpop.f32.mrb[0].mxu0
      %v534 = vadd.f32 0.0, %v533
      %v535 = vpop.f32.mrb[0].mxu0
      %536 = vdwg.mxu0
      %v537 = vadd.f32 %v460, %v531
      %v538 = vadd.f32 %v463, %v534
      %v539 = vpack.c.bf16 %v538, %v537
      %v541 = vunpack.c.l.b16 %v539
      %v542 = vunpack.c.h.b16 %v539
      %v543 = vpack.c.b16 %v541, %v541
      %v544 = vpack.c.b16 %v542, %v542
      %vm547 = vcmask 519168
      %548 = vst.msk [vmem:[%s262] sm:$0xf] %vm547, %v543
      %549 = vst.msk [vmem:[%s262 + $0x4] sm:$0xf] %vm547, %v544
      %v550 = vsel %vm297, %v537, 0.0
      %v551 = vsel %vm297, %v538, 0.0
      %v552 = vadd.f32 %v550, %v551
      %v553 = vrot.slane %v552, 4
      %v554 = vadd.f32 %v552, %v553
      %v555 = vrot.slane %v554, 2
      %v556 = vadd.f32 %v554, %v555
      %v557 = vrot.slane %v556, 1
      %v558 = vadd.f32 %v556, %v557
      %559 = vst.msk [vmem:[%s265] sm:$0x1] %vm294, %v558
      %v560 = vmul.f32 %v537, %v537
      %v561 = vmul.f32 %v538, %v538
      %v562 = vsel %vm297, %v560, 0.0
      %v563 = vsel %vm297, %v561, 0.0
      %v564 = vadd.f32 %v562, %v563
      %v565 = vrot.slane %v564, 4
      %v566 = vadd.f32 %v564, %v565
      %v567 = vrot.slane %v566, 2
      %v568 = vadd.f32 %v566, %v567
      %v569 = vrot.slane %v568, 1
      %v570 = vadd.f32 %v568, %v569
      %571 = vst.msk [vmem:[%s268] sm:$0x1] %vm294, %v570
      %p572 = scmp.lt.s32.totalorder %s18, 1
      %s573 = scalar_select %p572, %s18, 1
      %s574 = smul.addr %s573, 2
      %s575 = smul.addr %s574, 4
      %s576 = scalar_lea.vmem %s4, %s575
      %p577 = scmp.lt.s32.totalorder %s18, 1
      %s578 = scalar_select %p577, %s18, 1
      %s579 = scalar_lea.vmem %s5, %s578
      %p580 = scmp.lt.s32.totalorder %s18, 1
      %s581 = scalar_select %p580, %s18, 1
      %s582 = scalar_lea.vmem %s6, %s581
      // Predicated region
      $region37: #{resnet_basic_block.4} parent=35 // pred_check
        %p583 = pneg %p125
      $region38: #{resnet_basic_block.4} parent=35 // pred_check_branch
        %585 = sbr.rel (%p583) target = $region40
      $region39: #{resnet_basic_block.4} parent=35 // pred_region
        _
      $region40: #{resnet_basic_block.4} parent=35 // pred_fallthru
        _
      // Predicated region
      $region41: #{resnet_basic_block.4} parent=35 // pred_check
        %p586 = pneg %p151
      $region42: #{resnet_basic_block.4} parent=35 // pred_check_branch
        %588 = sbr.rel (%p586) target = $region44
      $region43: #{resnet_basic_block.4} parent=35 // pred_region
        _
      $region44: #{resnet_basic_block.4} parent=35 // pred_fallthru
        _
      // Predicated region
      $region45: #{resnet_basic_block.4} parent=35 // pred_check
        %p589 = pneg %p177
      $region46: #{resnet_basic_block.4} parent=35 // pred_check_branch
        %591 = sbr.rel (%p589) target = $region48
      $region47: #{resnet_basic_block.4} parent=35 // pred_region
        _
      $region48: #{resnet_basic_block.4} parent=35 // pred_fallthru
        _
    $region36: #{resnet_basic_block.4} parent=5 // pred_fallthru
      _
    %p592 = scmp.le.s32.totalorder 2, %s13
    // Predicated region
    $region49: #{resnet_basic_block.4} parent=5 // pred_check
      %p593 = pneg %p592
    $region50: #{resnet_basic_block.4} parent=5 // pred_check_branch
      %595 = sbr.rel (%p593) target = $region52
    $region51: #{resnet_basic_block.4} parent=5 // pred_region
      %s596 = ssub.s32 %s13, 2
      // Predicated region
      $region53: #{resnet_basic_block.4} parent=51 // pred_check
        %p597 = pneg %p131
      $region54: #{resnet_basic_block.4} parent=51 // pred_check_branch
        %599 = sbr.rel (%p597) target = $region56
      $region55: #{resnet_basic_block.4} parent=51 // pred_region
        %p600 = scmp.lt.s32.totalorder %s19, 1
        %s601 = scalar_select %p600, %s19, 1
        %s602 = smul.addr %s601, 2
        %s603 = smul.addr %s602, 4
        %s604 = scalar_lea.vmem %s4, %s603
      $region56: #{resnet_basic_block.4} parent=51 // pred_fallthru
        _
      // Predicated region
      $region57: #{resnet_basic_block.4} parent=51 // pred_check
        %p605 = pneg %p157
      $region58: #{resnet_basic_block.4} parent=51 // pred_check_branch
        %607 = sbr.rel (%p605) target = $region60
      $region59: #{resnet_basic_block.4} parent=51 // pred_region
        %p608 = scmp.lt.s32.totalorder %s19, 1
        %s609 = scalar_select %p608, %s19, 1
        %s610 = scalar_lea.vmem %s5, %s609
      $region60: #{resnet_basic_block.4} parent=51 // pred_fallthru
        _
      // Predicated region
      $region61: #{resnet_basic_block.4} parent=51 // pred_check
        %p611 = pneg %p183
      $region62: #{resnet_basic_block.4} parent=51 // pred_check_branch
        %613 = sbr.rel (%p611) target = $region64
      $region63: #{resnet_basic_block.4} parent=51 // pred_region
        %p614 = scmp.lt.s32.totalorder %s19, 1
        %s615 = scalar_select %p614, %s19, 1
        %s616 = scalar_lea.vmem %s6, %s615
      $region64: #{resnet_basic_block.4} parent=51 // pred_fallthru
        _
    $region52: #{resnet_basic_block.4} parent=5 // pred_fallthru
      _
  $region6: #{resnet_basic_block.4} parent=0 // loop_footer
    %s17 = sadd.s32 1, %s13
  $region7: #{resnet_basic_block.4} parent=0 // loop_footer_branch
    %12 = sbr.rel target = $region3
  $region8: #{resnet_basic_block.4} parent=0 // loop_exit
    _

</llo_original>
